<compile_context>
chip_gen: v7x
topology: tpu7x:2x2x1
jax: 0.10.0
libtpu: 0.0.40
codegen_flags: <defaults>
</compile_context>

<pallas_src>
import functools

import numpy as np
from numpy.random import RandomState

import jax
import jax.numpy as jnp
from jax.experimental import pallas as pl
from jax.experimental.pallas import tpu as pltpu


# ----------------------------------------------------------------------------
# Tiling constants.
# TM/TK = 128 keeps tiles aligned for the v5e 4x128^2 MXU and is still fine on
# v6e/v7x at these graph sizes; for large graphs on v6e/v7x bump to 256/512
# (re-derive against 64 MiB VMEM on v7x).
# ----------------------------------------------------------------------------
LANE = 128
TM = 128
TK = 128

# bf16 matmul operands with f32 accumulation (recommended for v6e/v7x).
# Set to jnp.float32 for bit-accurate f32 propagation (e.g. strict testing).
COMPUTE_DTYPE = jnp.bfloat16


def _round_up(x, m):
    return (x + m - 1) // m * m


# ----------------------------------------------------------------------------
# Pallas kernels
# ----------------------------------------------------------------------------
def _prop_layer_kernel(a_ref, e_ref, acc_in_ref, e_out_ref, acc_out_ref,
                       acc_scr):
    """One propagation layer tile: acc_scr += A[i,k] @ E[k]; at the last k,
    emit the new layer embeddings (compute dtype) and the updated running
    f32 sum over layers (acc_out = acc_in + new_layer)."""
    k = pl.program_id(1)

    @pl.when(k == 0)
    def _():
        acc_scr[...] = jnp.zeros_like(acc_scr)

    acc_scr[...] += jnp.dot(a_ref[...], e_ref[...],
                            preferred_element_type=jnp.float32)

    @pl.when(k == pl.num_programs(1) - 1)
    def _():
        e_out_ref[...] = acc_scr[...].astype(e_out_ref.dtype)
        acc_out_ref[...] = acc_in_ref[...] + acc_scr[...]


def lightgcn_prop_layer(adj, e, acc):
    """adj: [NP, NP] (compute dtype), e: [NP, DP] (compute dtype),
    acc: [NP, DP] f32 running layer sum.
    Returns (new_e [NP, DP] compute dtype, new_acc [NP, DP] f32)."""
    np_, dp = e.shape
    grid = (np_ // TM, np_ // TK)
    new_e, new_acc = pl.pallas_call(
        _prop_layer_kernel,
        out_shape=(
            jax.ShapeDtypeStruct((np_, dp), e.dtype),
            jax.ShapeDtypeStruct((np_, dp), jnp.float32),
        ),
        grid=grid,
        in_specs=[
            pl.BlockSpec((TM, TK), lambda i, k: (i, k)),   # A tile
            pl.BlockSpec((TK, dp), lambda i, k: (k, 0)),   # E tile
            pl.BlockSpec((TM, dp), lambda i, k: (i, 0)),   # running sum in
        ],
        out_specs=[
            pl.BlockSpec((TM, dp), lambda i, k: (i, 0)),   # new layer emb
            pl.BlockSpec((TM, dp), lambda i, k: (i, 0)),   # running sum out
        ],
        scratch_shapes=[pltpu.VMEM((TM, dp), jnp.float32)],
        # Reuse the running-sum HBM buffer (acc is dead after this call).
        input_output_aliases={2: 1},
        compiler_params=pltpu.CompilerParams(
            dimension_semantics=("parallel", "arbitrary"),
            vmem_limit_bytes=32 * 1024 * 1024,
        ),
    )(adj, e, acc)
    return new_e, new_acc


def _score_kernel(u_ref, i_ref, o_ref):
    """Scores on the lane axis: o[0, b] = sum_d u[d, b] * i[d, b]."""
    o_ref[...] = jnp.sum(u_ref[...] * i_ref[...], axis=0, keepdims=True)


def lightgcn_score(user_h, item_h):
    """user_h, item_h: [B, DP] f32 -> scores [B] f32 (lane-dense kernel)."""
    b, dp = user_h.shape
    bp = _round_up(b, LANE)
    # Layout plumbing: put the pair index on the lane axis so the kernel
    # output is a full-width (1, bp) store instead of a masked (b, 1) column.
    u_t = jnp.pad(user_h.T, ((0, 0), (0, bp - b)))
    i_t = jnp.pad(item_h.T, ((0, 0), (0, bp - b)))
    out = pl.pallas_call(
        _score_kernel,
        out_shape=jax.ShapeDtypeStruct((1, bp), jnp.float32),
        grid=(1,),
        in_specs=[
            pl.BlockSpec((dp, bp), lambda i: (0, 0)),
            pl.BlockSpec((dp, bp), lambda i: (0, 0)),
        ],
        out_specs=pl.BlockSpec((1, bp), lambda i: (0, 0)),
    )(u_t, i_t)
    return out[0, :b]


# ----------------------------------------------------------------------------
# LightGCN forward (matches the PyTorch module's forward semantics)
# ----------------------------------------------------------------------------
@functools.partial(jax.jit, static_argnames=("n_layers",))
def lightgcn_forward(norm_adj, user_emb_w, item_emb_w,
                     users_index, items_index, *, n_layers):
    n_users, d = user_emb_w.shape
    n_items = item_emb_w.shape[0]
    n_nodes = n_users + n_items

    # Pad nodes to a tile multiple and factors to a full lane width.
    np_ = _round_up(n_nodes, max(TM, TK))
    dp = _round_up(d, LANE)

    # get_ego_embeddings(): concat users then items along the node axis.
    ego = jnp.concatenate([user_emb_w, item_emb_w], axis=0)          # (N, D)
    ego_pad = jnp.pad(ego, ((0, np_ - n_nodes), (0, dp - d)))        # (NP, DP) f32
    adj_pad = jnp.pad(norm_adj,
                      ((0, np_ - n_nodes), (0, np_ - n_nodes))
                      ).astype(COMPUTE_DTYPE)                        # (NP, NP)

    cur = ego_pad.astype(COMPUTE_DTYPE)   # current layer embeddings
    acc = ego_pad                         # f32 running sum over layers (E0)
    for _ in range(n_layers):
        cur, acc = lightgcn_prop_layer(adj_pad, cur, acc)
    mean_emb = acc * (1.0 / float(n_layers + 1))                     # f32

    # Split into user / item embeddings (padding rows live past n_nodes).
    user_all = mean_emb[:n_users]
    item_all = mean_emb[n_users:n_nodes]

    # Row gather for the query pairs (glue).
    user_h1 = jnp.take(user_all, users_index, axis=0)
    item_h1 = jnp.take(item_all, items_index, axis=0)

    # (user_h1 * item_h1).sum(1) via the lane-dense score kernel.
    return lightgcn_score(user_h1, item_h1)


# ----------------------------------------------------------------------------
# Deterministic adjacency construction (mirrors get_norm_adj_mat with
# adj_type='pre'), built dense on the host since shapes are small here.
# TODO(synk): for production-size graphs keep A sparse and gather nonzero
# column blocks with scalar-prefetched offsets instead of densifying.
# ----------------------------------------------------------------------------
def build_norm_adj(n_users, n_items, user_np, item_np, ratings):
    n_nodes = n_users + n_items
    adj = np.zeros((n_nodes, n_nodes), dtype=np.float64)
    np.add.at(adj, (user_np, item_np + n_users), ratings)
    adj = adj + adj.T
    rowsum = adj.sum(axis=1)
    with np.errstate(divide="ignore"):
        d_inv = np.power(rowsum, -0.5)
    d_inv[np.isinf(d_inv)] = 0.0
    norm_adj = (d_inv[:, None] * adj) * d_inv[None, :]
    return norm_adj.astype(np.float32)


if __name__ == "__main__":
    N_USERS = 90
    N_ITEMS = 150
    N_FACTORS = 20
    N_LAYERS = 3
    N_QUERIES = 16

    # Embedding init exactly as in the module: 0.1 * RandomState(1).rand(...)
    rs = RandomState(1)
    user_emb_w = jnp.asarray(
        0.1 * rs.rand(N_USERS, N_FACTORS), dtype=jnp.float32)
    item_emb_w = jnp.asarray(
        0.1 * rs.rand(N_ITEMS, N_FACTORS), dtype=jnp.float32)

    # Synthetic deterministic interaction dataset for the adjacency matrix.
    rs_data = RandomState(7)
    n_inter = 600
    user_np = rs_data.randint(0, N_USERS, size=n_inter)
    item_np = rs_data.randint(0, N_ITEMS, size=n_inter)
    ratings = np.ones(n_inter, dtype=np.float64)
    norm_adj = jnp.asarray(build_norm_adj(
        N_USERS, N_ITEMS, user_np, item_np, ratings))

    # Query indices (deterministic via jax PRNG).
    key = jax.random.PRNGKey(0)
    ku, ki = jax.random.split(key)
    users_index = jax.random.randint(ku, (N_QUERIES,), 0, N_USERS, jnp.int32)
    items_index = jax.random.randint(ki, (N_QUERIES,), 0, N_ITEMS, jnp.int32)

    r_h = lightgcn_forward(norm_adj, user_emb_w, item_emb_w,
                           users_index, items_index, n_layers=N_LAYERS)
    r_h = jax.block_until_ready(r_h)

    # Pure-JAX f32 reference of the same forward math.
    ego = jnp.concatenate([user_emb_w, item_emb_w], axis=0)
    embs = [ego]
    cur = ego
    for _ in range(N_LAYERS):
        cur = norm_adj @ cur
        embs.append(cur)
    mean_emb = jnp.mean(jnp.stack(embs, axis=1), axis=1)
    u_ref = mean_emb[:N_USERS][users_index]
    i_ref = mean_emb[N_USERS:][items_index]
    ref = jnp.sum(u_ref * i_ref, axis=1)

    if COMPUTE_DTYPE == jnp.bfloat16:
        rtol, atol = 5e-2, 1e-3   # bf16 operands / f32 accumulation
    else:
        rtol, atol = 1e-5, 1e-6
    np.testing.assert_allclose(np.asarray(r_h), np.asarray(ref),
                               rtol=rtol, atol=atol)

    print("KERNEL_OK")
</pallas_src>

<mosaic_0001>
module attributes {stable_mosaic.version = 11 : i64} {
  func.func @_prop_layer_kernel(%arg0: i32, %arg1: i32, %arg2: memref<128x128xbf16, #tpu.memory_space<vmem>>, %arg3: memref<128x128xbf16, #tpu.memory_space<vmem>>, %arg4: memref<128x128xf32, #tpu.memory_space<vmem>>, %arg5: memref<128x128xbf16, #tpu.memory_space<vmem>>, %arg6: memref<128x128xf32, #tpu.memory_space<vmem>>, %arg7: memref<128x128xf32, #tpu.memory_space<vmem>>) attributes {dimension_semantics = [#tpu.dimension_semantics<parallel>, #tpu.dimension_semantics<arbitrary>], iteration_bounds = array<i64: 2, 2>, scalar_prefetch = 0 : i64, scratch_operands = 1 : i64, tpu.core_type = #tpu.core_type<tc>, window_params = [{transform_indices = @transform_0, window_bounds = array<i64: 128, 128>}, {transform_indices = @transform_1, window_bounds = array<i64: 128, 128>}, {transform_indices = @transform_2, window_bounds = array<i64: 128, 128>}, {transform_indices = @transform_3, window_bounds = array<i64: 128, 128>}, {transform_indices = @transform_4, window_bounds = array<i64: 128, 128>}]} {
    %c0_i32 = arith.constant 0 : i32
    %0 = arith.cmpi eq, %arg1, %c0_i32 : i32
    %1 = arith.extui %0 : i1 to i32
    %c0_i32_0 = arith.constant 0 : i32
    %2 = arith.cmpi ne, %1, %c0_i32_0 : i32
    scf.if %2 {
      %cst_9 = arith.constant 0.000000e+00 : f32
      %12 = vector.broadcast %cst_9 : f32 to vector<128x128xf32>
      %c0_10 = arith.constant 0 : index
      %c0_11 = arith.constant 0 : index
      %13 = vector.load %arg7[%c0_10, %c0_11] : memref<128x128xf32, #tpu.memory_space<vmem>>, vector<128x128xf32>
      tpu.vector_store %arg7[%c0_10, %c0_11], %12 {strides = array<i32>} : memref<128x128xf32, #tpu.memory_space<vmem>>, vector<128x128xf32>,
    } else {
    }
    %c0 = arith.constant 0 : index
    %c0_1 = arith.constant 0 : index
    %3 = vector.load %arg7[%c0, %c0_1] : memref<128x128xf32, #tpu.memory_space<vmem>>, vector<128x128xf32>
    %c0_2 = arith.constant 0 : index
    %c0_3 = arith.constant 0 : index
    %4 = vector.load %arg2[%c0_2, %c0_3] : memref<128x128xbf16, #tpu.memory_space<vmem>>, vector<128x128xbf16>
    %c0_4 = arith.constant 0 : index
    %c0_5 = arith.constant 0 : index
    %5 = vector.load %arg3[%c0_4, %c0_5] : memref<128x128xbf16, #tpu.memory_space<vmem>>, vector<128x128xbf16>
    %cst = arith.constant dense<0.000000e+00> : vector<128x128xf32>
    %6 = tpu.matmul %4, %5, %cst {dimension_numbers = #tpu.dot_dimension_numbers<[1], [0], [0], [1], [0, 0, 1, 1], [], []>} : vector<128x128xbf16>, vector<128x128xbf16>, vector<128x128xf32> -> vector<128x128xf32>
    %7 = arith.addf %3, %6 : vector<128x128xf32>
    %c0_6 = arith.constant 0 : index
    %c0_7 = arith.constant 0 : index
    %8 = vector.load %arg7[%c0_6, %c0_7] : memref<128x128xf32, #tpu.memory_space<vmem>>, vector<128x128xf32>
    tpu.vector_store %arg7[%c0_6, %c0_7], %7 {strides = array<i32>} : memref<128x128xf32, #tpu.memory_space<vmem>>, vector<128x128xf32>,
    %c1_i32 = arith.constant 1 : i32
    %9 = arith.cmpi eq, %arg1, %c1_i32 : i32
    %10 = arith.extui %9 : i1 to i32
    %c0_i32_8 = arith.constant 0 : i32
    %11 = arith.cmpi ne, %10, %c0_i32_8 : i32
    scf.if %11 {
      %c0_9 = arith.constant 0 : index
      %c0_10 = arith.constant 0 : index
      %12 = vector.load %arg7[%c0_9, %c0_10] : memref<128x128xf32, #tpu.memory_space<vmem>>, vector<128x128xf32>
      %13 = arith.truncf %12 : vector<128x128xf32> to vector<128x128xbf16>
      %c0_11 = arith.constant 0 : index
      %c0_12 = arith.constant 0 : index
      %14 = vector.load %arg5[%c0_11, %c0_12] : memref<128x128xbf16, #tpu.memory_space<vmem>>, vector<128x128xbf16>
      tpu.vector_store %arg5[%c0_11, %c0_12], %13 {strides = array<i32>} : memref<128x128xbf16, #tpu.memory_space<vmem>>, vector<128x128xbf16>,
      %c0_13 = arith.constant 0 : index
      %c0_14 = arith.constant 0 : index
      %15 = vector.load %arg4[%c0_13, %c0_14] : memref<128x128xf32, #tpu.memory_space<vmem>>, vector<128x128xf32>
      %c0_15 = arith.constant 0 : index
      %c0_16 = arith.constant 0 : index
      %16 = vector.load %arg7[%c0_15, %c0_16] : memref<128x128xf32, #tpu.memory_space<vmem>>, vector<128x128xf32>
      %17 = arith.addf %15, %16 : vector<128x128xf32>
      %c0_17 = arith.constant 0 : index
      %c0_18 = arith.constant 0 : index
      %18 = vector.load %arg6[%c0_17, %c0_18] : memref<128x128xf32, #tpu.memory_space<vmem>>, vector<128x128xf32>
      tpu.vector_store %arg6[%c0_17, %c0_18], %17 {strides = array<i32>} : memref<128x128xf32, #tpu.memory_space<vmem>>, vector<128x128xf32>,
    } else {
    }
    return
  }
  func.func @transform_0(%arg0: i32, %arg1: i32) -> (i32, i32) {
    %c0_i32 = arith.constant 0 : i32
    return %arg0, %arg1 : i32, i32
  }
  func.func @transform_1(%arg0: i32, %arg1: i32) -> (i32, i32) {
    %c0_i32 = arith.constant 0 : i32
    %c0_i32_0 = arith.constant 0 : i32
    return %arg1, %c0_i32 : i32, i32
  }
  func.func @transform_2(%arg0: i32, %arg1: i32) -> (i32, i32) {
    %c0_i32 = arith.constant 0 : i32
    %c0_i32_0 = arith.constant 0 : i32
    return %arg0, %c0_i32 : i32, i32
  }
  func.func @transform_3(%arg0: i32, %arg1: i32) -> (i32, i32) {
    %c0_i32 = arith.constant 0 : i32
    %c0_i32_0 = arith.constant 0 : i32
    return %arg0, %c0_i32 : i32, i32
  }
  func.func @transform_4(%arg0: i32, %arg1: i32) -> (i32, i32) {
    %c0_i32 = arith.constant 0 : i32
    %c0_i32_0 = arith.constant 0 : i32
    return %arg0, %c0_i32 : i32, i32
  }
}

module attributes {stable_mosaic.version = 11 : i64} {
  func.func @_prop_layer_kernel(%arg0: i32, %arg1: i32, %arg2: memref<128x128xbf16, #tpu.memory_space<vmem>>, %arg3: memref<128x128xbf16, #tpu.memory_space<vmem>>, %arg4: memref<128x128xf32, #tpu.memory_space<vmem>>, %arg5: memref<128x128xbf16, #tpu.memory_space<vmem>>, %arg6: memref<128x128xf32, #tpu.memory_space<vmem>>, %arg7: memref<128x128xf32, #tpu.memory_space<vmem>>) attributes {dimension_semantics = [#tpu.dimension_semantics<parallel>, #tpu.dimension_semantics<arbitrary>], iteration_bounds = array<i64: 2, 2>, scalar_prefetch = 0 : i64, scratch_operands = 1 : i64, tpu.core_type = #tpu.core_type<tc>, window_params = [{transform_indices = @transform_0, window_bounds = array<i64: 128, 128>}, {transform_indices = @transform_1, window_bounds = array<i64: 128, 128>}, {transform_indices = @transform_2, window_bounds = array<i64: 128, 128>}, {transform_indices = @transform_3, window_bounds = array<i64: 128, 128>}, {transform_indices = @transform_4, window_bounds = array<i64: 128, 128>}]} {
    %c0_i32 = arith.constant 0 : i32
    %0 = arith.cmpi eq, %arg1, %c0_i32 : i32
    %1 = arith.extui %0 : i1 to i32
    %c0_i32_0 = arith.constant 0 : i32
    %2 = arith.cmpi ne, %1, %c0_i32_0 : i32
    scf.if %2 {
      %cst_9 = arith.constant 0.000000e+00 : f32
      %12 = vector.broadcast %cst_9 : f32 to vector<128x128xf32>
      %c0_10 = arith.constant 0 : index
      %c0_11 = arith.constant 0 : index
      %13 = vector.load %arg7[%c0_10, %c0_11] : memref<128x128xf32, #tpu.memory_space<vmem>>, vector<128x128xf32>
      tpu.vector_store %arg7[%c0_10, %c0_11], %12 {strides = array<i32>} : memref<128x128xf32, #tpu.memory_space<vmem>>, vector<128x128xf32>,
    } else {
    }
    %c0 = arith.constant 0 : index
    %c0_1 = arith.constant 0 : index
    %3 = vector.load %arg7[%c0, %c0_1] : memref<128x128xf32, #tpu.memory_space<vmem>>, vector<128x128xf32>
    %c0_2 = arith.constant 0 : index
    %c0_3 = arith.constant 0 : index
    %4 = vector.load %arg2[%c0_2, %c0_3] : memref<128x128xbf16, #tpu.memory_space<vmem>>, vector<128x128xbf16>
    %c0_4 = arith.constant 0 : index
    %c0_5 = arith.constant 0 : index
    %5 = vector.load %arg3[%c0_4, %c0_5] : memref<128x128xbf16, #tpu.memory_space<vmem>>, vector<128x128xbf16>
    %cst = arith.constant dense<0.000000e+00> : vector<128x128xf32>
    %6 = tpu.matmul %4, %5, %cst {dimension_numbers = #tpu.dot_dimension_numbers<[1], [0], [0], [1], [0, 0, 1, 1], [], []>} : vector<128x128xbf16>, vector<128x128xbf16>, vector<128x128xf32> -> vector<128x128xf32>
    %7 = arith.addf %3, %6 : vector<128x128xf32>
    %c0_6 = arith.constant 0 : index
    %c0_7 = arith.constant 0 : index
    %8 = vector.load %arg7[%c0_6, %c0_7] : memref<128x128xf32, #tpu.memory_space<vmem>>, vector<128x128xf32>
    tpu.vector_store %arg7[%c0_6, %c0_7], %7 {strides = array<i32>} : memref<128x128xf32, #tpu.memory_space<vmem>>, vector<128x128xf32>,
    %c1_i32 = arith.constant 1 : i32
    %9 = arith.cmpi eq, %arg1, %c1_i32 : i32
    %10 = arith.extui %9 : i1 to i32
    %c0_i32_8 = arith.constant 0 : i32
    %11 = arith.cmpi ne, %10, %c0_i32_8 : i32
    scf.if %11 {
      %c0_9 = arith.constant 0 : index
      %c0_10 = arith.constant 0 : index
      %12 = vector.load %arg7[%c0_9, %c0_10] : memref<128x128xf32, #tpu.memory_space<vmem>>, vector<128x128xf32>
      %13 = arith.truncf %12 : vector<128x128xf32> to vector<128x128xbf16>
      %c0_11 = arith.constant 0 : index
      %c0_12 = arith.constant 0 : index
      %14 = vector.load %arg5[%c0_11, %c0_12] : memref<128x128xbf16, #tpu.memory_space<vmem>>, vector<128x128xbf16>
      tpu.vector_store %arg5[%c0_11, %c0_12], %13 {strides = array<i32>} : memref<128x128xbf16, #tpu.memory_space<vmem>>, vector<128x128xbf16>,
      %c0_13 = arith.constant 0 : index
      %c0_14 = arith.constant 0 : index
      %15 = vector.load %arg4[%c0_13, %c0_14] : memref<128x128xf32, #tpu.memory_space<vmem>>, vector<128x128xf32>
      %c0_15 = arith.constant 0 : index
      %c0_16 = arith.constant 0 : index
      %16 = vector.load %arg7[%c0_15, %c0_16] : memref<128x128xf32, #tpu.memory_space<vmem>>, vector<128x128xf32>
      %17 = arith.addf %15, %16 : vector<128x128xf32>
      %c0_17 = arith.constant 0 : index
      %c0_18 = arith.constant 0 : index
      %18 = vector.load %arg6[%c0_17, %c0_18] : memref<128x128xf32, #tpu.memory_space<vmem>>, vector<128x128xf32>
      tpu.vector_store %arg6[%c0_17, %c0_18], %17 {strides = array<i32>} : memref<128x128xf32, #tpu.memory_space<vmem>>, vector<128x128xf32>,
    } else {
    }
    return
  }
  func.func @transform_0(%arg0: i32, %arg1: i32) -> (i32, i32) {
    %c0_i32 = arith.constant 0 : i32
    return %arg0, %arg1 : i32, i32
  }
  func.func @transform_1(%arg0: i32, %arg1: i32) -> (i32, i32) {
    %c0_i32 = arith.constant 0 : i32
    %c0_i32_0 = arith.constant 0 : i32
    return %arg1, %c0_i32 : i32, i32
  }
  func.func @transform_2(%arg0: i32, %arg1: i32) -> (i32, i32) {
    %c0_i32 = arith.constant 0 : i32
    %c0_i32_0 = arith.constant 0 : i32
    return %arg0, %c0_i32 : i32, i32
  }
  func.func @transform_3(%arg0: i32, %arg1: i32) -> (i32, i32) {
    %c0_i32 = arith.constant 0 : i32
    %c0_i32_0 = arith.constant 0 : i32
    return %arg0, %c0_i32 : i32, i32
  }
  func.func @transform_4(%arg0: i32, %arg1: i32) -> (i32, i32) {
    %c0_i32 = arith.constant 0 : i32
    %c0_i32_0 = arith.constant 0 : i32
    return %arg0, %c0_i32 : i32, i32
  }
}

module attributes {stable_mosaic.version = 11 : i64} {
  func.func @_score_kernel(%arg0: i32, %arg1: memref<128x128xf32, #tpu.memory_space<vmem>>, %arg2: memref<128x128xf32, #tpu.memory_space<vmem>>, %arg3: memref<1x128xf32, #tpu.memory_space<vmem>>) attributes {dimension_semantics = [#tpu.dimension_semantics<arbitrary>], iteration_bounds = array<i64: 1>, scalar_prefetch = 0 : i64, scratch_operands = 0 : i64, tpu.core_type = #tpu.core_type<tc>, window_params = [{pipeline_mode = #tpu.pipeline_mode<synchronous>, transform_indices = @transform_0, window_bounds = array<i64: 128, 128>}, {pipeline_mode = #tpu.pipeline_mode<synchronous>, transform_indices = @transform_1, window_bounds = array<i64: 128, 128>}, {pipeline_mode = #tpu.pipeline_mode<synchronous>, transform_indices = @transform_2, window_bounds = array<i64: 1, 128>}]} {
    %c0 = arith.constant 0 : index
    %c0_0 = arith.constant 0 : index
    %0 = vector.load %arg1[%c0, %c0_0] : memref<128x128xf32, #tpu.memory_space<vmem>>, vector<128x128xf32>
    %c0_1 = arith.constant 0 : index
    %c0_2 = arith.constant 0 : index
    %1 = vector.load %arg2[%c0_1, %c0_2] : memref<128x128xf32, #tpu.memory_space<vmem>>, vector<128x128xf32>
    %2 = arith.mulf %0, %1 : vector<128x128xf32>
    %cst = arith.constant dense<0.000000e+00> : vector<128xf32>
    %3 = vector.multi_reduction <add>, %2, %cst [0] : vector<128x128xf32> to vector<128xf32>
    %4 = vector.shape_cast %3 : vector<128xf32> to vector<1x128xf32>
    %c0_3 = arith.constant 0 : index
    %c0_4 = arith.constant 0 : index
    %5 = vector.load %arg3[%c0_3, %c0_4] : memref<1x128xf32, #tpu.memory_space<vmem>>, vector<1x128xf32>
    tpu.vector_store %arg3[%c0_3, %c0_4], %4 {strides = array<i32>} : memref<1x128xf32, #tpu.memory_space<vmem>>, vector<1x128xf32>,
    return
  }
  func.func @transform_0(%arg0: i32) -> (i32, i32) {
    %c0_i32 = arith.constant 0 : i32
    %c0_i32_0 = arith.constant 0 : i32
    %c0_i32_1 = arith.constant 0 : i32
    return %c0_i32, %c0_i32_0 : i32, i32
  }
  func.func @transform_1(%arg0: i32) -> (i32, i32) {
    %c0_i32 = arith.constant 0 : i32
    %c0_i32_0 = arith.constant 0 : i32
    %c0_i32_1 = arith.constant 0 : i32
    return %c0_i32, %c0_i32_0 : i32, i32
  }
  func.func @transform_2(%arg0: i32) -> (i32, i32) {
    %c0_i32 = arith.constant 0 : i32
    %c0_i32_0 = arith.constant 0 : i32
    %c0_i32_1 = arith.constant 0 : i32
    return %c0_i32, %c0_i32_0 : i32, i32
  }
}

</mosaic_0001>

<llo_original>
// kernel: lightgcn_forward.6
$region0: #{lightgcn_forward.6}
  #allocation0 [shape = 'u32[]', space=smem, size = 0x4, offset = 0x4, fixed_abs, tag = 'smem constant byte address 0x4 - core index']
  #allocation1 [shape = 'u32[144,128]{1,0:T(1,128)}', space=vmem, size = 0x12000, scoped, tag = 'internal scratch']
  #allocation2 [shape = 'f32[128,128]{1,0:T(8,128)}', space=vmem, size = 0x10000, scoped, tag = 'scratch operand']
  %s0 = inlined_call_operand.vmem [shape: bf16[256,256], index: 0, kind: input, shape index: {}]
  %s1 = inlined_call_operand.vmem [shape: bf16[256,128], index: 1, kind: input, shape index: {}]
  %s2 = inlined_call_operand.vmem [shape: f32[256,128], index: 2, kind: input, shape index: {}, may-alias: {2,4}]
  %s3 = inlined_call_operand.hbm [shape: bf16[256,128], index: 3, kind: output, shape index: {0}]
  %s4 = inlined_call_operand.vmem [shape: f32[256,128], index: 4, kind: output, shape index: {1}, may-alias: {2,4}]
  %5 = xla_tuple %s3, %s4
  %s6 = sld [smem:[#allocation0]]
  $region102: #{lightgcn_forward.6} parent=0
    _
  %s8 = ssub.s32 1, %s6
  %s9 = scalar_select 0, %s8, %s6
  $region1: #{lightgcn_forward.6} parent=0
    #allocation3 [shape = 'u8[65536]{0}', space=vmem, size = 0x10000, scoped, tag = 'input window, operand 0']
    #allocation4 [shape = 'u8[65536]{0}', space=vmem, size = 0x10000, scoped, tag = 'output window, operand 0']
    #allocation5 [shape = 's32[2]{0}', space=sflag, size = 0x8, scoped, tag = 'scoped memory for lightgcn_forward.6']
    %10 = vsyncpa [#allocation5], 0
    %s11 = scalar_lea.sflag [#allocation5], 1
    %12 = vsyncpa %s11, 0
    loop: start=0, step=1, limit=6
    $region2: #{lightgcn_forward.6} parent=1 // loop_pre_header
      _
    $region3: #{lightgcn_forward.6} parent=1 // loop_header
      %s14 = sphi 0, %s18
      %p15 = scmp.ge.s32.totalorder %s14, 6
      %s21 = sphi 0, %s33
      %s22 = sphi 0, %s29
      %s23 = sphi 0, %s21
      %s24 = sphi 0, %s22
      %s25 = sphi 0, %s23
      %s26 = sphi 0, %s24
      %s38 = sphi 0, %s40
      %s41 = sphi 0, %s38
      %s42 = sphi 0, %s41
      %s58 = sphi 0, %s42
      %s64 = sphi 0, %s66
      %s67 = sphi 0, %s64
      %s68 = sphi 0, %s67
      %s84 = sphi 0, %s68
      %s90 = sphi 0, %s92
      %s93 = sphi 0, %s90
      %s94 = sphi 0, %s93
      %s110 = sphi 0, %s94
      %s116 = sphi 0, %s118
      %s119 = sphi 0, %s116
      %s120 = sphi 0, %s119
      %s136 = sphi 0, %s120
      %s142 = sphi 0, %s144
      %s145 = sphi 0, %s142
      %s146 = sphi 0, %s145
      %s162 = sphi 0, %s146
    $region4: #{lightgcn_forward.6} parent=1 // loop_header_branch
      %17 = sbr.rel (%p15) target = $region8
    $region5: #{lightgcn_forward.6} parent=1 // loop_body
      %s19 = ssub.s32 %s14, 1
      %s20 = ssub.s32 %s14, 2
      %s27 = sadd.s32 1, %s22
      %p28 = scmp.ge.s32.totalorder %s27, 2
      %s29 = scalar_select %p28, 0, %s27
      %s30 = sadd.s32 1, %s21
      %s31 = scalar_select %p28, %s30, %s21
      %p32 = scmp.ge.s32.totalorder %s31, 2
      %s33 = scalar_select %p32, 0, %s31
      %s34 = ssub.s32 %s21, %s33
      %s35 = ssub.s32 %s22, %s29
      %s36 = sor.u32 %s34, %s35
      %p37 = scmp.eq.s32.totalorder %s36, 0
      %s39 = sadd.s32 %s38, 1
      %s40 = scalar_select %p37, %s38, %s39
      %p43 = pneg %p37
      %p44 = scmp.eq.s32.totalorder %s14, 3
      %p45 = por %p43, %p44
      %p46 = scmp.ne.s32.totalorder %s38, %s41
      %p47 = scmp.eq.s32.totalorder %s14, 0
      %p48 = por %p46, %p47
      %p49 = scmp.ne.s32.totalorder %s38, %s41
      %p50 = scmp.eq.s32.totalorder %s19, 3
      %p51 = por %p49, %p50
      %p52 = scmp.ne.s32.totalorder %s41, %s42
      %p53 = scmp.eq.s32.totalorder %s19, 0
      %p54 = por %p52, %p53
      %p55 = scmp.ne.s32.totalorder %s41, %s42
      %p56 = scmp.eq.s32.totalorder %s20, 3
      %p57 = por %p55, %p56
      %p59 = scmp.ne.s32.totalorder %s42, %s58
      %p60 = scmp.eq.s32.totalorder %s20, 0
      %p61 = por %p59, %p60
      %s62 = ssub.s32 %s22, %s29
      %p63 = scmp.eq.s32.totalorder %s62, 0
      %s65 = sadd.s32 %s64, 1
      %s66 = scalar_select %p63, %s64, %s65
      %p69 = pneg %p63
      %p70 = scmp.eq.s32.totalorder %s14, 3
      %p71 = por %p69, %p70
      %p72 = scmp.ne.s32.totalorder %s64, %s67
      %p73 = scmp.eq.s32.totalorder %s14, 0
      %p74 = por %p72, %p73
      %p75 = scmp.ne.s32.totalorder %s64, %s67
      %p76 = scmp.eq.s32.totalorder %s19, 3
      %p77 = por %p75, %p76
      %p78 = scmp.ne.s32.totalorder %s67, %s68
      %p79 = scmp.eq.s32.totalorder %s19, 0
      %p80 = por %p78, %p79
      %p81 = scmp.ne.s32.totalorder %s67, %s68
      %p82 = scmp.eq.s32.totalorder %s20, 3
      %p83 = por %p81, %p82
      %p85 = scmp.ne.s32.totalorder %s68, %s84
      %p86 = scmp.eq.s32.totalorder %s20, 0
      %p87 = por %p85, %p86
      %s88 = ssub.s32 %s21, %s33
      %p89 = scmp.eq.s32.totalorder %s88, 0
      %s91 = sadd.s32 %s90, 1
      %s92 = scalar_select %p89, %s90, %s91
      %p95 = pneg %p89
      %p96 = scmp.eq.s32.totalorder %s14, 3
      %p97 = por %p95, %p96
      %p98 = scmp.ne.s32.totalorder %s90, %s93
      %p99 = scmp.eq.s32.totalorder %s14, 0
      %p100 = por %p98, %p99
      %p101 = scmp.ne.s32.totalorder %s90, %s93
      %p102 = scmp.eq.s32.totalorder %s19, 3
      %p103 = por %p101, %p102
      %p104 = scmp.ne.s32.totalorder %s93, %s94
      %p105 = scmp.eq.s32.totalorder %s19, 0
      %p106 = por %p104, %p105
      %p107 = scmp.ne.s32.totalorder %s93, %s94
      %p108 = scmp.eq.s32.totalorder %s20, 3
      %p109 = por %p107, %p108
      %p111 = scmp.ne.s32.totalorder %s94, %s110
      %p112 = scmp.eq.s32.totalorder %s20, 0
      %p113 = por %p111, %p112
      %s114 = ssub.s32 %s21, %s33
      %p115 = scmp.eq.s32.totalorder %s114, 0
      %s117 = sadd.s32 %s116, 1
      %s118 = scalar_select %p115, %s116, %s117
      %p121 = pneg %p115
      %p122 = scmp.eq.s32.totalorder %s14, 3
      %p123 = por %p121, %p122
      %p124 = scmp.ne.s32.totalorder %s116, %s119
      %p125 = scmp.eq.s32.totalorder %s14, 0
      %p126 = por %p124, %p125
      %p127 = scmp.ne.s32.totalorder %s116, %s119
      %p128 = scmp.eq.s32.totalorder %s19, 3
      %p129 = por %p127, %p128
      %p130 = scmp.ne.s32.totalorder %s119, %s120
      %p131 = scmp.eq.s32.totalorder %s19, 0
      %p132 = por %p130, %p131
      %p133 = scmp.ne.s32.totalorder %s119, %s120
      %p134 = scmp.eq.s32.totalorder %s20, 3
      %p135 = por %p133, %p134
      %p137 = scmp.ne.s32.totalorder %s120, %s136
      %p138 = scmp.eq.s32.totalorder %s20, 0
      %p139 = por %p137, %p138
      %s140 = ssub.s32 %s21, %s33
      %p141 = scmp.eq.s32.totalorder %s140, 0
      %s143 = sadd.s32 %s142, 1
      %s144 = scalar_select %p141, %s142, %s143
      %p147 = pneg %p141
      %p148 = scmp.eq.s32.totalorder %s14, 3
      %p149 = por %p147, %p148
      %p150 = scmp.ne.s32.totalorder %s142, %s145
      %p151 = scmp.eq.s32.totalorder %s14, 0
      %p152 = por %p150, %p151
      %p153 = scmp.ne.s32.totalorder %s142, %s145
      %p154 = scmp.eq.s32.totalorder %s19, 3
      %p155 = por %p153, %p154
      %p156 = scmp.ne.s32.totalorder %s145, %s146
      %p157 = scmp.eq.s32.totalorder %s19, 0
      %p158 = por %p156, %p157
      %p159 = scmp.ne.s32.totalorder %s145, %s146
      %p160 = scmp.eq.s32.totalorder %s20, 3
      %p161 = por %p159, %p160
      %p163 = scmp.ne.s32.totalorder %s146, %s162
      %p164 = scmp.eq.s32.totalorder %s20, 0
      %p165 = por %p163, %p164
      %p166 = scmp.le.s32.totalorder 1, %s14
      %p167 = scmp.lt.s32.totalorder %s14, 5
      %p168 = pnand %p166, %p167
      %p169 = pneg %p168
      // Predicated region
      $region9: #{lightgcn_forward.6} parent=5 // pred_check
        _
      $region10: #{lightgcn_forward.6} parent=5 // pred_check_branch
        %171 = sbr.rel (%p168) target = $region12
      $region11: #{lightgcn_forward.6} parent=5 // pred_region
        %s172 = ssub.s32 %s14, 1
      $region12: #{lightgcn_forward.6} parent=5 // pred_fallthru
        _
      %p173 = scmp.lt.s32.totalorder %s14, 4
      // Predicated region
      $region13: #{lightgcn_forward.6} parent=5 // pred_check
        %p174 = pneg %p173
      $region14: #{lightgcn_forward.6} parent=5 // pred_check_branch
        %176 = sbr.rel (%p174) target = $region16
      $region15: #{lightgcn_forward.6} parent=5 // pred_region
        // Predicated region
        $region17: #{lightgcn_forward.6} parent=15 // pred_check
          %p177 = pneg %p48
        $region18: #{lightgcn_forward.6} parent=15 // pred_check_branch
          %179 = sbr.rel (%p177) target = $region20
        $region19: #{lightgcn_forward.6} parent=15 // pred_region
          %s180 = sand.u32 %s38, 1
          %s181 = sand.u32 %s38, 1
          %s182 = smul.addr %s181, 64
          %s183 = scalar_lea.vmem [#allocation3], %s182
          %s184 = smul.u32 16, %s21
          %s185 = smul.addr %s184, 2
          %s186 = sadd.s32 %s22, %s185
          %s187 = smul.addr %s186, 4
          %s188 = scalar_lea.vmem %s0, %s187
          // Predicated region
          $region21: #{lightgcn_forward.6} parent=19 // pred_check
            _
          $region22: #{lightgcn_forward.6} parent=19 // pred_check_branch
            %190 = sbr.rel (0) target = $region24
          $region23: #{lightgcn_forward.6} parent=19 // pred_region
            // Predicated region
            $region25: #{lightgcn_forward.6} parent=23 // pred_check
              _
            $region26: #{lightgcn_forward.6} parent=23 // pred_check_branch
              %192 = sbr.rel target = $region28
            $region27: #{lightgcn_forward.6} parent=23 // pred_region
              // Predicated region
              $region40: #{lightgcn_forward.6} parent=27 // pred_check
                _
              $region41: #{lightgcn_forward.6} parent=27 // pred_check_branch
                %237 = sbr.rel (0) target = $region43
              $region42: #{lightgcn_forward.6} parent=27 // pred_region
                loop: start=0, step=1, limit=1
                $region44: #{lightgcn_forward.6} parent=42 // loop_pre_header
                  _
                $region45: #{lightgcn_forward.6} parent=42 // loop_header
                  %s239 = sphi 0, %s243
                  %p240 = scmp.ge.s32.totalorder %s239, 1
                  %s244 = sphi %s188, %s188
                  %s245 = sphi %s183, %s183
                $region46: #{lightgcn_forward.6} parent=42 // loop_header_branch
                  %242 = sbr.rel (%p240) target = $region50
                $region47: #{lightgcn_forward.6} parent=42 // loop_body
                  _
                $region48: #{lightgcn_forward.6} parent=42 // loop_footer
                  %s243 = sadd.s32 1, %s239
                $region49: #{lightgcn_forward.6} parent=42 // loop_footer_branch
                  %238 = sbr.rel target = $region45
                $region50: #{lightgcn_forward.6} parent=42 // loop_exit
                  _
                loop: start=0, step=1, limit=1
                $region51: #{lightgcn_forward.6} parent=42 // loop_pre_header
                  _
                $region52: #{lightgcn_forward.6} parent=42 // loop_header
                  %s248 = sphi 0, %s252
                  %p249 = scmp.ge.s32.totalorder %s248, 1
                  %s253 = sphi %s188, %s188
                  %s254 = sphi %s183, %s183
                $region53: #{lightgcn_forward.6} parent=42 // loop_header_branch
                  %251 = sbr.rel (%p249) target = $region57
                $region54: #{lightgcn_forward.6} parent=42 // loop_body
                  %v255 = vld [vmem:[%s253] sm:$0xf]
                  %256 = vst [vmem:[%s254] sm:$0xf] %v255
                  %v257 = vld [vmem:[%s253 + $0x8] sm:$0xf]
                  %258 = vst [vmem:[%s254 + $0x4] sm:$0xf] %v257
                  %v259 = vld [vmem:[%s253 + $0x10] sm:$0xf]
                  %260 = vst [vmem:[%s254 + $0x8] sm:$0xf] %v259
                  %v261 = vld [vmem:[%s253 + $0x18] sm:$0xf]
                  %262 = vst [vmem:[%s254 + $0xc] sm:$0xf] %v261
                  %v263 = vld [vmem:[%s253 + $0x20] sm:$0xf]
                  %264 = vst [vmem:[%s254 + $0x10] sm:$0xf] %v263
                  %v265 = vld [vmem:[%s253 + $0x28] sm:$0xf]
                  %266 = vst [vmem:[%s254 + $0x14] sm:$0xf] %v265
                  %v267 = vld [vmem:[%s253 + $0x30] sm:$0xf]
                  %268 = vst [vmem:[%s254 + $0x18] sm:$0xf] %v267
                  %v269 = vld [vmem:[%s253 + $0x38] sm:$0xf]
                  %270 = vst [vmem:[%s254 + $0x1c] sm:$0xf] %v269
                  %v271 = vld [vmem:[%s253 + $0x40] sm:$0xf]
                  %272 = vst [vmem:[%s254 + $0x20] sm:$0xf] %v271
                  %v273 = vld [vmem:[%s253 + $0x48] sm:$0xf]
                  %274 = vst [vmem:[%s254 + $0x24] sm:$0xf] %v273
                  %v275 = vld [vmem:[%s253 + $0x50] sm:$0xf]
                  %276 = vst [vmem:[%s254 + $0x28] sm:$0xf] %v275
                  %v277 = vld [vmem:[%s253 + $0x58] sm:$0xf]
                  %278 = vst [vmem:[%s254 + $0x2c] sm:$0xf] %v277
                  %v279 = vld [vmem:[%s253 + $0x60] sm:$0xf]
                  %280 = vst [vmem:[%s254 + $0x30] sm:$0xf] %v279
                  %v281 = vld [vmem:[%s253 + $0x68] sm:$0xf]
                  %282 = vst [vmem:[%s254 + $0x34] sm:$0xf] %v281
                  %v283 = vld [vmem:[%s253 + $0x70] sm:$0xf]
                  %284 = vst [vmem:[%s254 + $0x38] sm:$0xf] %v283
                  %v285 = vld [vmem:[%s253 + $0x78] sm:$0xf]
                  %286 = vst [vmem:[%s254 + $0x3c] sm:$0xf] %v285
                $region55: #{lightgcn_forward.6} parent=42 // loop_footer
                  %s252 = sadd.s32 1, %s248
                $region56: #{lightgcn_forward.6} parent=42 // loop_footer_branch
                  %247 = sbr.rel target = $region52
                $region57: #{lightgcn_forward.6} parent=42 // loop_exit
                  _
              $region43: #{lightgcn_forward.6} parent=27 // pred_fallthru
                _
            $region28: #{lightgcn_forward.6} parent=23 // pred_fallthru
              _
            // Predicated region
            $region29: #{lightgcn_forward.6} parent=23 // pred_check
              _
            $region30: #{lightgcn_forward.6} parent=23 // pred_check_branch
              %194 = sbr.rel (0) target = $region32
            $region31: #{lightgcn_forward.6} parent=23 // pred_region
              loop: start=0, step=1, limit=1
              $region33: #{lightgcn_forward.6} parent=31 // loop_pre_header
                _
              $region34: #{lightgcn_forward.6} parent=31 // loop_header
                %s197 = sphi 0, %s201
                %p198 = scmp.ge.s32.totalorder %s197, 1
                %s202 = sphi %s188, %s188
                %s203 = sphi %s183, %s183
              $region35: #{lightgcn_forward.6} parent=31 // loop_header_branch
                %200 = sbr.rel (%p198) target = $region39
              $region36: #{lightgcn_forward.6} parent=31 // loop_body
                %v204 = vld [vmem:[%s202] sm:$0xf]
                %205 = vst [vmem:[%s203] sm:$0xf] %v204
                %v206 = vld [vmem:[%s202 + $0x8] sm:$0xf]
                %207 = vst [vmem:[%s203 + $0x4] sm:$0xf] %v206
                %v208 = vld [vmem:[%s202 + $0x10] sm:$0xf]
                %209 = vst [vmem:[%s203 + $0x8] sm:$0xf] %v208
                %v210 = vld [vmem:[%s202 + $0x18] sm:$0xf]
                %211 = vst [vmem:[%s203 + $0xc] sm:$0xf] %v210
                %v212 = vld [vmem:[%s202 + $0x20] sm:$0xf]
                %213 = vst [vmem:[%s203 + $0x10] sm:$0xf] %v212
                %v214 = vld [vmem:[%s202 + $0x28] sm:$0xf]
                %215 = vst [vmem:[%s203 + $0x14] sm:$0xf] %v214
                %v216 = vld [vmem:[%s202 + $0x30] sm:$0xf]
                %217 = vst [vmem:[%s203 + $0x18] sm:$0xf] %v216
                %v218 = vld [vmem:[%s202 + $0x38] sm:$0xf]
                %219 = vst [vmem:[%s203 + $0x1c] sm:$0xf] %v218
                %v220 = vld [vmem:[%s202 + $0x40] sm:$0xf]
                %221 = vst [vmem:[%s203 + $0x20] sm:$0xf] %v220
                %v222 = vld [vmem:[%s202 + $0x48] sm:$0xf]
                %223 = vst [vmem:[%s203 + $0x24] sm:$0xf] %v222
                %v224 = vld [vmem:[%s202 + $0x50] sm:$0xf]
                %225 = vst [vmem:[%s203 + $0x28] sm:$0xf] %v224
                %v226 = vld [vmem:[%s202 + $0x58] sm:$0xf]
                %227 = vst [vmem:[%s203 + $0x2c] sm:$0xf] %v226
                %v228 = vld [vmem:[%s202 + $0x60] sm:$0xf]
                %229 = vst [vmem:[%s203 + $0x30] sm:$0xf] %v228
                %v230 = vld [vmem:[%s202 + $0x68] sm:$0xf]
                %231 = vst [vmem:[%s203 + $0x34] sm:$0xf] %v230
                %v232 = vld [vmem:[%s202 + $0x70] sm:$0xf]
                %233 = vst [vmem:[%s203 + $0x38] sm:$0xf] %v232
                %v234 = vld [vmem:[%s202 + $0x78] sm:$0xf]
                %235 = vst [vmem:[%s203 + $0x3c] sm:$0xf] %v234
              $region37: #{lightgcn_forward.6} parent=31 // loop_footer
                %s201 = sadd.s32 1, %s197
              $region38: #{lightgcn_forward.6} parent=31 // loop_footer_branch
                %196 = sbr.rel target = $region34
              $region39: #{lightgcn_forward.6} parent=31 // loop_exit
                _
            $region32: #{lightgcn_forward.6} parent=23 // pred_fallthru
              _
          $region24: #{lightgcn_forward.6} parent=19 // pred_fallthru
            _
          %287 = vnop
        $region20: #{lightgcn_forward.6} parent=15 // pred_fallthru
          _
        // Predicated region
        $region58: #{lightgcn_forward.6} parent=15 // pred_check
          %p288 = pneg %p74
        $region59: #{lightgcn_forward.6} parent=15 // pred_check_branch
          %290 = sbr.rel (%p288) target = $region61
        $region60: #{lightgcn_forward.6} parent=15 // pred_region
          %s291 = smul.u32 16, %s22
          %p292 = scmp.lt.s32.totalorder %s291, 31
          %s293 = scalar_select %p292, %s291, 31
          %s294 = smul.addr %s293, 4
          %s295 = scalar_lea.vmem %s1, %s294
          %s296 = smul.u32 16, %s22
        $region61: #{lightgcn_forward.6} parent=15 // pred_fallthru
          _
        // Predicated region
        $region62: #{lightgcn_forward.6} parent=15 // pred_check
          %p297 = pneg %p100
        $region63: #{lightgcn_forward.6} parent=15 // pred_check_branch
          %299 = sbr.rel (%p297) target = $region65
        $region64: #{lightgcn_forward.6} parent=15 // pred_region
          %s300 = smul.u32 16, %s21
          %p301 = scmp.lt.s32.totalorder %s300, 31
          %s302 = scalar_select %p301, %s300, 31
          %s303 = smul.addr %s302, 8
          %s304 = scalar_lea.vmem %s2, %s303
          %s305 = smul.u32 16, %s21
        $region65: #{lightgcn_forward.6} parent=15 // pred_fallthru
          _
      $region16: #{lightgcn_forward.6} parent=5 // pred_fallthru
        _
      %p306 = scmp.le.s32.totalorder 1, %s14
      %p307 = scmp.lt.s32.totalorder %s14, 5
      %p308 = pnand %p306, %p307
      %p309 = pneg %p308
      // Predicated region
      $region66: #{lightgcn_forward.6} parent=5 // pred_check
        _
      $region67: #{lightgcn_forward.6} parent=5 // pred_check_branch
        %311 = sbr.rel (%p308) target = $region69
      $region68: #{lightgcn_forward.6} parent=5 // pred_region
        %s312 = ssub.s32 %s14, 1
        %s313 = sand.u32 %s41, 1
        %s314 = sand.u32 %s41, 1
        %s315 = smul.addr %s314, 64
        %s316 = scalar_lea.vmem [#allocation3], %s315
        // Predicated region
        $region70: #{lightgcn_forward.6} parent=68 // pred_check
          %p317 = pneg %p54
        $region71: #{lightgcn_forward.6} parent=68 // pred_check_branch
          %319 = sbr.rel (%p317) target = $region73
        $region72: #{lightgcn_forward.6} parent=68 // pred_region
          _
        $region73: #{lightgcn_forward.6} parent=68 // pred_fallthru
          _
        %s320 = sand.u32 %s41, 1
        %s321 = sand.u32 %s41, 1
        %s322 = smul.addr %s321, 64
        %s323 = scalar_lea.vmem [#allocation3], %s322
        %p324 = pneg %p54
        %p325 = pneg %p51
        %s326 = smul.u32 16, %s24
        %p327 = scmp.lt.s32.totalorder %s326, 31
        %s328 = scalar_select %p327, %s326, 31
        %s329 = smul.addr %s328, 4
        %s330 = scalar_lea.vmem %s1, %s329
        %p331 = pneg %p80
        %p332 = pneg %p77
        %s333 = smul.u32 16, %s23
        %p334 = scmp.lt.s32.totalorder %s333, 31
        %s335 = scalar_select %p334, %s333, 31
        %s336 = smul.addr %s335, 8
        %s337 = scalar_lea.vmem %s2, %s336
        %p338 = pneg %p106
        %p339 = pneg %p103
        %p340 = pneg %p132
        %p341 = pneg %p129
        %s342 = sand.u32 %s119, 1
        %s343 = scalar_lea.sflag [#allocation5], %s342
        %s344 = sand.u32 %s119, 1
        %s345 = smul.addr %s344, 64
        %s346 = scalar_lea.vmem [#allocation4], %s345
        %p347 = pneg %p158
        %p348 = pneg %p155
        %s349 = smul.u32 16, %s23
        %p350 = scmp.lt.s32.totalorder %s349, 31
        %s351 = scalar_select %p350, %s349, 31
        %s352 = smul.addr %s351, 8
        %s353 = scalar_lea.vmem %s4, %s352
        %s354 = smul.u32 16, %s23
        %s355 = smul.u32 16, %s24
        %p356 = scmp.lt.s32.totalorder %s355, 31
        %s357 = scalar_select %p356, %s355, 31
        %s358 = smul.addr %s357, 4
        %s359 = scalar_lea.vmem %s1, %s358
        %s360 = smul.u32 16, %s24
        %s361 = smul.u32 16, %s23
        %p362 = scmp.lt.s32.totalorder %s361, 31
        %s363 = scalar_select %p362, %s361, 31
        %s364 = smul.addr %s363, 8
        %s365 = scalar_lea.vmem %s2, %s364
        %s366 = smul.u32 16, %s23
        %s367 = smul.u32 16, %s23
        %s368 = smul.u32 16, %s23
        %p369 = scmp.lt.s32.totalorder %s368, 31
        %s370 = scalar_select %p369, %s368, 31
        %s371 = smul.addr %s370, 8
        %s372 = scalar_lea.vmem %s4, %s371
        %s373 = smul.u32 16, %s23
        %p375 = scmp.eq.s32.totalorder %s24, 0
        // Predicated region
        $region74: #{lightgcn_forward.6} parent=68 // pred_check
          %p376 = pneg %p375
        $region75: #{lightgcn_forward.6} parent=68 // pred_check_branch
          %378 = sbr.rel (%p376) target = $region77
        $region76: #{lightgcn_forward.6} parent=68 // pred_region
          %379 = vst [vmem:[#allocation2] sm:$0xff] 0.0
          %380 = vst [vmem:[#allocation2 + $0x8] sm:$0xff] 0.0
          %381 = vst [vmem:[#allocation2 + $0x10] sm:$0xff] 0.0
          %382 = vst [vmem:[#allocation2 + $0x18] sm:$0xff] 0.0
          %383 = vst [vmem:[#allocation2 + $0x20] sm:$0xff] 0.0
          %384 = vst [vmem:[#allocation2 + $0x28] sm:$0xff] 0.0
          %385 = vst [vmem:[#allocation2 + $0x30] sm:$0xff] 0.0
          %386 = vst [vmem:[#allocation2 + $0x38] sm:$0xff] 0.0
          %387 = vst [vmem:[#allocation2 + $0x40] sm:$0xff] 0.0
          %388 = vst [vmem:[#allocation2 + $0x48] sm:$0xff] 0.0
          %389 = vst [vmem:[#allocation2 + $0x50] sm:$0xff] 0.0
          %390 = vst [vmem:[#allocation2 + $0x58] sm:$0xff] 0.0
          %391 = vst [vmem:[#allocation2 + $0x60] sm:$0xff] 0.0
          %392 = vst [vmem:[#allocation2 + $0x68] sm:$0xff] 0.0
          %393 = vst [vmem:[#allocation2 + $0x70] sm:$0xff] 0.0
          %394 = vst [vmem:[#allocation2 + $0x78] sm:$0xff] 0.0
        $region77: #{lightgcn_forward.6} parent=68 // pred_fallthru
          _
        %v395 = vld [vmem:[#allocation2] sm:$0xff]
        %v396 = vld [vmem:[#allocation2 + $0x8] sm:$0xff]
        %v397 = vld [vmem:[#allocation2 + $0x10] sm:$0xff]
        %v398 = vld [vmem:[#allocation2 + $0x18] sm:$0xff]
        %v399 = vld [vmem:[#allocation2 + $0x20] sm:$0xff]
        %v400 = vld [vmem:[#allocation2 + $0x28] sm:$0xff]
        %v401 = vld [vmem:[#allocation2 + $0x30] sm:$0xff]
        %v402 = vld [vmem:[#allocation2 + $0x38] sm:$0xff]
        %v403 = vld [vmem:[#allocation2 + $0x40] sm:$0xff]
        %v404 = vld [vmem:[#allocation2 + $0x48] sm:$0xff]
        %v405 = vld [vmem:[#allocation2 + $0x50] sm:$0xff]
        %v406 = vld [vmem:[#allocation2 + $0x58] sm:$0xff]
        %v407 = vld [vmem:[#allocation2 + $0x60] sm:$0xff]
        %v408 = vld [vmem:[#allocation2 + $0x68] sm:$0xff]
        %v409 = vld [vmem:[#allocation2 + $0x70] sm:$0xff]
        %v410 = vld [vmem:[#allocation2 + $0x78] sm:$0xff]
        %v411 = vld [vmem:[%s316] sm:$0xf]
        %v412 = vld [vmem:[%s316 + $0x4] sm:$0xf]
        %v413 = vld [vmem:[%s316 + $0x8] sm:$0xf]
        %v414 = vld [vmem:[%s316 + $0xc] sm:$0xf]
        %v415 = vld [vmem:[%s316 + $0x10] sm:$0xf]
        %v416 = vld [vmem:[%s316 + $0x14] sm:$0xf]
        %v417 = vld [vmem:[%s316 + $0x18] sm:$0xf]
        %v418 = vld [vmem:[%s316 + $0x1c] sm:$0xf]
        %v419 = vld [vmem:[%s316 + $0x20] sm:$0xf]
        %v420 = vld [vmem:[%s316 + $0x24] sm:$0xf]
        %v421 = vld [vmem:[%s316 + $0x28] sm:$0xf]
        %v422 = vld [vmem:[%s316 + $0x2c] sm:$0xf]
        %v423 = vld [vmem:[%s316 + $0x30] sm:$0xf]
        %v424 = vld [vmem:[%s316 + $0x34] sm:$0xf]
        %v425 = vld [vmem:[%s316 + $0x38] sm:$0xf]
        %v426 = vld [vmem:[%s316 + $0x3c] sm:$0xf]
        %v427 = vld [vmem:[%s359] sm:$0xf]
        %v428 = vld [vmem:[%s359 + $0x4] sm:$0xf]
        %v429 = vld [vmem:[%s359 + $0x8] sm:$0xf]
        %v430 = vld [vmem:[%s359 + $0xc] sm:$0xf]
        %v431 = vld [vmem:[%s359 + $0x10] sm:$0xf]
        %v432 = vld [vmem:[%s359 + $0x14] sm:$0xf]
        %v433 = vld [vmem:[%s359 + $0x18] sm:$0xf]
        %v434 = vld [vmem:[%s359 + $0x1c] sm:$0xf]
        %v435 = vld [vmem:[%s359 + $0x20] sm:$0xf]
        %v436 = vld [vmem:[%s359 + $0x24] sm:$0xf]
        %v437 = vld [vmem:[%s359 + $0x28] sm:$0xf]
        %v438 = vld [vmem:[%s359 + $0x2c] sm:$0xf]
        %v439 = vld [vmem:[%s359 + $0x30] sm:$0xf]
        %v440 = vld [vmem:[%s359 + $0x34] sm:$0xf]
        %v441 = vld [vmem:[%s359 + $0x38] sm:$0xf]
        %v442 = vld [vmem:[%s359 + $0x3c] sm:$0xf]
        %v459 = vunpack.c.l.b16 %v411
        %v460 = vunpack.c.l.b16 %v412
        %v461 = vunpack.c.l.b16 %v413
        %v462 = vunpack.c.l.b16 %v414
        %v463 = vunpack.c.l.b16 %v415
        %v464 = vunpack.c.l.b16 %v416
        %v465 = vunpack.c.l.b16 %v417
        %v466 = vunpack.c.l.b16 %v418
        %v467 = vunpack.c.l.b16 %v419
        %v468 = vunpack.c.l.b16 %v420
        %v469 = vunpack.c.l.b16 %v421
        %v470 = vunpack.c.l.b16 %v422
        %v471 = vunpack.c.l.b16 %v423
        %v472 = vunpack.c.l.b16 %v424
        %v473 = vunpack.c.l.b16 %v425
        %v474 = vunpack.c.l.b16 %v426
        %v475 = vpack.c.b16 %v460, %v459
        %v476 = vpack.c.b16 %v462, %v461
        %v477 = vpack.c.b16 %v464, %v463
        %v478 = vpack.c.b16 %v466, %v465
        %v479 = vpack.c.b16 %v468, %v467
        %v480 = vpack.c.b16 %v470, %v469
        %v481 = vpack.c.b16 %v472, %v471
        %v482 = vpack.c.b16 %v474, %v473
        %v507 = vunpack.c.l.b16 %v427
        %v508 = vunpack.c.l.b16 %v428
        %v509 = vunpack.c.l.b16 %v429
        %v510 = vunpack.c.l.b16 %v430
        %v511 = vunpack.c.l.b16 %v431
        %v512 = vunpack.c.l.b16 %v432
        %v513 = vunpack.c.l.b16 %v433
        %v514 = vunpack.c.l.b16 %v434
        %v515 = vunpack.c.l.b16 %v435
        %v516 = vunpack.c.l.b16 %v436
        %v517 = vunpack.c.l.b16 %v437
        %v518 = vunpack.c.l.b16 %v438
        %v519 = vunpack.c.l.b16 %v439
        %v520 = vunpack.c.l.b16 %v440
        %v521 = vunpack.c.l.b16 %v441
        %v522 = vunpack.c.l.b16 %v442
        %v523 = vpack.c.b16 %v508, %v507
        %v524 = vpack.c.b16 %v510, %v509
        %v525 = vpack.c.b16 %v512, %v511
        %v526 = vpack.c.b16 %v514, %v513
        %v527 = vpack.c.b16 %v516, %v515
        %v528 = vpack.c.b16 %v518, %v517
        %v529 = vpack.c.b16 %v520, %v519
        %v530 = vpack.c.b16 %v522, %v521
        %539 = vmatprep.subr.bf16.mxu0 0
        %540 = vmatpush1.bf16.msra.mxu0 %v523
        %541 = vmatprep.subr.bf16.mxu0 0
        %542 = vmatpush1.bf16.msra.mxu0 %v524
        %543 = vmatprep.subr.bf16.mxu0 0
        %544 = vmatpush1.bf16.msra.mxu0 %v525
        %545 = vmatprep.subr.bf16.mxu0 0
        %546 = vmatpush1.bf16.msra.mxu0 %v526
        %547 = vmatprep.subr.bf16.mxu0 0
        %548 = vmatpush1.bf16.msra.mxu0 %v527
        %549 = vmatprep.subr.bf16.mxu0 0
        %550 = vmatpush1.bf16.msra.mxu0 %v528
        %551 = vmatprep.subr.bf16.mxu0 0
        %552 = vmatpush1.bf16.msra.mxu0 %v529
        %553 = vmatprep.subr.bf16.mxu0 0
        %554 = vmatpush1.bf16.msra.mxu0 %v530
        %555 = vmatprep.subr.bf16.mxu0 0
        %556 = vmatpush1.bf16.msra.mxu0 0
        %557 = vmatprep.subr.bf16.mxu0 0
        %558 = vmatpush1.bf16.msra.mxu0 0
        %559 = vmatprep.subr.bf16.mxu0 0
        %560 = vmatpush1.bf16.msra.mxu0 0
        %561 = vmatprep.subr.bf16.mxu0 0
        %562 = vmatpush1.bf16.msra.mxu0 0
        %563 = vmatprep.subr.bf16.mxu0 0
        %564 = vmatpush1.bf16.msra.mxu0 0
        %565 = vmatprep.subr.bf16.mxu0 0
        %566 = vmatpush1.bf16.msra.mxu0 0
        %567 = vmatprep.subr.bf16.mxu0 0
        %568 = vmatpush1.bf16.msra.mxu0 0
        %569 = vmatprep.subr.bf16.mxu0 0
        %570 = vmatpush1.bf16.msra.mxu0 0
        %571 = vmatprep.mubr.bf16.mxu0 0
        %572 = vmatmul.mubr.bf16.gmra.mrb[0].mxu0 %v475
        %v573 = vpop.f32.mrb[0].mxu0
        %v574 = vadd.f32 0.0, %v573
        %v575 = vpop.f32.mrb[0].mxu0
        %v576 = vpop.f32.mrb[0].mxu0
        %v577 = vadd.f32 0.0, %v576
        %v578 = vpop.f32.mrb[0].mxu0
        %579 = vmatprep.mubr.bf16.mxu0 0
        %580 = vmatmul.mubr.bf16.gmra.mrb[0].mxu0 %v476
        %v581 = vpop.f32.mrb[0].mxu0
        %v582 = vadd.f32 0.0, %v581
        %v583 = vpop.f32.mrb[0].mxu0
        %v584 = vpop.f32.mrb[0].mxu0
        %v585 = vadd.f32 0.0, %v584
        %v586 = vpop.f32.mrb[0].mxu0
        %587 = vmatprep.mubr.bf16.mxu0 0
        %588 = vmatmul.mubr.bf16.gmra.mrb[0].mxu0 %v477
        %v589 = vpop.f32.mrb[0].mxu0
        %v590 = vadd.f32 0.0, %v589
        %v591 = vpop.f32.mrb[0].mxu0
        %v592 = vpop.f32.mrb[0].mxu0
        %v593 = vadd.f32 0.0, %v592
        %v594 = vpop.f32.mrb[0].mxu0
        %595 = vmatprep.mubr.bf16.mxu0 0
        %596 = vmatmul.mubr.bf16.gmra.mrb[0].mxu0 %v478
        %v597 = vpop.f32.mrb[0].mxu0
        %v598 = vadd.f32 0.0, %v597
        %v599 = vpop.f32.mrb[0].mxu0
        %v600 = vpop.f32.mrb[0].mxu0
        %v601 = vadd.f32 0.0, %v600
        %v602 = vpop.f32.mrb[0].mxu0
        %603 = vmatprep.mubr.bf16.mxu0 0
        %604 = vmatmul.mubr.bf16.gmra.mrb[0].mxu0 %v479
        %v605 = vpop.f32.mrb[0].mxu0
        %v606 = vadd.f32 0.0, %v605
        %v607 = vpop.f32.mrb[0].mxu0
        %v608 = vpop.f32.mrb[0].mxu0
        %v609 = vadd.f32 0.0, %v608
        %v610 = vpop.f32.mrb[0].mxu0
        %611 = vmatprep.mubr.bf16.mxu0 0
        %612 = vmatmul.mubr.bf16.gmra.mrb[0].mxu0 %v480
        %v613 = vpop.f32.mrb[0].mxu0
        %v614 = vadd.f32 0.0, %v613
        %v615 = vpop.f32.mrb[0].mxu0
        %v616 = vpop.f32.mrb[0].mxu0
        %v617 = vadd.f32 0.0, %v616
        %v618 = vpop.f32.mrb[0].mxu0
        %619 = vmatprep.mubr.bf16.mxu0 0
        %620 = vmatmul.mubr.bf16.gmra.mrb[0].mxu0 %v481
        %v621 = vpop.f32.mrb[0].mxu0
        %v622 = vadd.f32 0.0, %v621
        %v623 = vpop.f32.mrb[0].mxu0
        %v624 = vpop.f32.mrb[0].mxu0
        %v625 = vadd.f32 0.0, %v624
        %v626 = vpop.f32.mrb[0].mxu0
        %627 = vmatprep.mubr.bf16.mxu0 0
        %628 = vmatmul.mubr.bf16.gmra.mrb[0].mxu0 %v482
        %v629 = vpop.f32.mrb[0].mxu0
        %v630 = vadd.f32 0.0, %v629
        %v631 = vpop.f32.mrb[0].mxu0
        %v632 = vpop.f32.mrb[0].mxu0
        %v633 = vadd.f32 0.0, %v632
        %v634 = vpop.f32.mrb[0].mxu0
        %635 = vdwg.mxu0
        %v636 = vadd.f32 %v395, %v574
        %v637 = vadd.f32 %v396, %v577
        %v638 = vadd.f32 %v397, %v582
        %v639 = vadd.f32 %v398, %v585
        %v640 = vadd.f32 %v399, %v590
        %v641 = vadd.f32 %v400, %v593
        %v642 = vadd.f32 %v401, %v598
        %v643 = vadd.f32 %v402, %v601
        %v644 = vadd.f32 %v403, %v606
        %v645 = vadd.f32 %v404, %v609
        %v646 = vadd.f32 %v405, %v614
        %v647 = vadd.f32 %v406, %v617
        %v648 = vadd.f32 %v407, %v622
        %v649 = vadd.f32 %v408, %v625
        %v650 = vadd.f32 %v409, %v630
        %v651 = vadd.f32 %v410, %v633
        %652 = vst [vmem:[#allocation2] sm:$0xff] %v636
        %653 = vst [vmem:[#allocation2 + $0x8] sm:$0xff] %v637
        %654 = vst [vmem:[#allocation2 + $0x10] sm:$0xff] %v638
        %655 = vst [vmem:[#allocation2 + $0x18] sm:$0xff] %v639
        %656 = vst [vmem:[#allocation2 + $0x20] sm:$0xff] %v640
        %657 = vst [vmem:[#allocation2 + $0x28] sm:$0xff] %v641
        %658 = vst [vmem:[#allocation2 + $0x30] sm:$0xff] %v642
        %659 = vst [vmem:[#allocation2 + $0x38] sm:$0xff] %v643
        %660 = vst [vmem:[#allocation2 + $0x40] sm:$0xff] %v644
        %661 = vst [vmem:[#allocation2 + $0x48] sm:$0xff] %v645
        %662 = vst [vmem:[#allocation2 + $0x50] sm:$0xff] %v646
        %663 = vst [vmem:[#allocation2 + $0x58] sm:$0xff] %v647
        %664 = vst [vmem:[#allocation2 + $0x60] sm:$0xff] %v648
        %665 = vst [vmem:[#allocation2 + $0x68] sm:$0xff] %v649
        %666 = vst [vmem:[#allocation2 + $0x70] sm:$0xff] %v650
        %667 = vst [vmem:[#allocation2 + $0x78] sm:$0xff] %v651
        %p668 = scmp.eq.s32.totalorder %s24, 1
        // Predicated region
        $region78: #{lightgcn_forward.6} parent=68 // pred_check
          %p669 = pneg %p668
        $region79: #{lightgcn_forward.6} parent=68 // pred_check_branch
          %671 = sbr.rel (%p669) target = $region81
        $region80: #{lightgcn_forward.6} parent=68 // pred_region
          %v672 = vld [vmem:[#allocation2] sm:$0xff]
          %v673 = vld [vmem:[#allocation2 + $0x8] sm:$0xff]
          %v674 = vld [vmem:[#allocation2 + $0x10] sm:$0xff]
          %v675 = vld [vmem:[#allocation2 + $0x18] sm:$0xff]
          %v676 = vld [vmem:[#allocation2 + $0x20] sm:$0xff]
          %v677 = vld [vmem:[#allocation2 + $0x28] sm:$0xff]
          %v678 = vld [vmem:[#allocation2 + $0x30] sm:$0xff]
          %v679 = vld [vmem:[#allocation2 + $0x38] sm:$0xff]
          %v680 = vld [vmem:[#allocation2 + $0x40] sm:$0xff]
          %v681 = vld [vmem:[#allocation2 + $0x48] sm:$0xff]
          %v682 = vld [vmem:[#allocation2 + $0x50] sm:$0xff]
          %v683 = vld [vmem:[#allocation2 + $0x58] sm:$0xff]
          %v684 = vld [vmem:[#allocation2 + $0x60] sm:$0xff]
          %v685 = vld [vmem:[#allocation2 + $0x68] sm:$0xff]
          %v686 = vld [vmem:[#allocation2 + $0x70] sm:$0xff]
          %v687 = vld [vmem:[#allocation2 + $0x78] sm:$0xff]
          %v688 = vpack.c.bf16 %v673, %v672
          %v689 = vpack.c.bf16 %v675, %v674
          %v690 = vpack.c.bf16 %v677, %v676
          %v691 = vpack.c.bf16 %v679, %v678
          %v692 = vpack.c.bf16 %v681, %v680
          %v693 = vpack.c.bf16 %v683, %v682
          %v694 = vpack.c.bf16 %v685, %v684
          %v695 = vpack.c.bf16 %v687, %v686
          %v704 = vunpack.c.l.b16 %v688
          %v705 = vunpack.c.h.b16 %v688
          %v706 = vunpack.c.l.b16 %v689
          %v707 = vunpack.c.h.b16 %v689
          %v708 = vunpack.c.l.b16 %v690
          %v709 = vunpack.c.h.b16 %v690
          %v710 = vunpack.c.l.b16 %v691
          %v711 = vunpack.c.h.b16 %v691
          %v712 = vunpack.c.l.b16 %v692
          %v713 = vunpack.c.h.b16 %v692
          %v714 = vunpack.c.l.b16 %v693
          %v715 = vunpack.c.h.b16 %v693
          %v716 = vunpack.c.l.b16 %v694
          %v717 = vunpack.c.h.b16 %v694
          %v718 = vunpack.c.l.b16 %v695
          %v719 = vunpack.c.h.b16 %v695
          %v720 = vpack.c.b16 %v704, %v704
          %v721 = vpack.c.b16 %v705, %v705
          %v722 = vpack.c.b16 %v706, %v706
          %v723 = vpack.c.b16 %v707, %v707
          %v724 = vpack.c.b16 %v708, %v708
          %v725 = vpack.c.b16 %v709, %v709
          %v726 = vpack.c.b16 %v710, %v710
          %v727 = vpack.c.b16 %v711, %v711
          %v728 = vpack.c.b16 %v712, %v712
          %v729 = vpack.c.b16 %v713, %v713
          %v730 = vpack.c.b16 %v714, %v714
          %v731 = vpack.c.b16 %v715, %v715
          %v732 = vpack.c.b16 %v716, %v716
          %v733 = vpack.c.b16 %v717, %v717
          %v734 = vpack.c.b16 %v718, %v718
          %v735 = vpack.c.b16 %v719, %v719
          %752 = vst [vmem:[%s346] sm:$0xf] %v720
          %753 = vst [vmem:[%s346 + $0x4] sm:$0xf] %v721
          %754 = vst [vmem:[%s346 + $0x8] sm:$0xf] %v722
          %755 = vst [vmem:[%s346 + $0xc] sm:$0xf] %v723
          %756 = vst [vmem:[%s346 + $0x10] sm:$0xf] %v724
          %757 = vst [vmem:[%s346 + $0x14] sm:$0xf] %v725
          %758 = vst [vmem:[%s346 + $0x18] sm:$0xf] %v726
          %759 = vst [vmem:[%s346 + $0x1c] sm:$0xf] %v727
          %760 = vst [vmem:[%s346 + $0x20] sm:$0xf] %v728
          %761 = vst [vmem:[%s346 + $0x24] sm:$0xf] %v729
          %762 = vst [vmem:[%s346 + $0x28] sm:$0xf] %v730
          %763 = vst [vmem:[%s346 + $0x2c] sm:$0xf] %v731
          %764 = vst [vmem:[%s346 + $0x30] sm:$0xf] %v732
          %765 = vst [vmem:[%s346 + $0x34] sm:$0xf] %v733
          %766 = vst [vmem:[%s346 + $0x38] sm:$0xf] %v734
          %767 = vst [vmem:[%s346 + $0x3c] sm:$0xf] %v735
          %v768 = vld [vmem:[%s365] sm:$0xff]
          %v769 = vld [vmem:[%s365 + $0x8] sm:$0xff]
          %v770 = vld [vmem:[%s365 + $0x10] sm:$0xff]
          %v771 = vld [vmem:[%s365 + $0x18] sm:$0xff]
          %v772 = vld [vmem:[%s365 + $0x20] sm:$0xff]
          %v773 = vld [vmem:[%s365 + $0x28] sm:$0xff]
          %v774 = vld [vmem:[%s365 + $0x30] sm:$0xff]
          %v775 = vld [vmem:[%s365 + $0x38] sm:$0xff]
          %v776 = vld [vmem:[%s365 + $0x40] sm:$0xff]
          %v777 = vld [vmem:[%s365 + $0x48] sm:$0xff]
          %v778 = vld [vmem:[%s365 + $0x50] sm:$0xff]
          %v779 = vld [vmem:[%s365 + $0x58] sm:$0xff]
          %v780 = vld [vmem:[%s365 + $0x60] sm:$0xff]
          %v781 = vld [vmem:[%s365 + $0x68] sm:$0xff]
          %v782 = vld [vmem:[%s365 + $0x70] sm:$0xff]
          %v783 = vld [vmem:[%s365 + $0x78] sm:$0xff]
          %v784 = vld [vmem:[#allocation2] sm:$0xff]
          %v785 = vld [vmem:[#allocation2 + $0x8] sm:$0xff]
          %v786 = vld [vmem:[#allocation2 + $0x10] sm:$0xff]
          %v787 = vld [vmem:[#allocation2 + $0x18] sm:$0xff]
          %v788 = vld [vmem:[#allocation2 + $0x20] sm:$0xff]
          %v789 = vld [vmem:[#allocation2 + $0x28] sm:$0xff]
          %v790 = vld [vmem:[#allocation2 + $0x30] sm:$0xff]
          %v791 = vld [vmem:[#allocation2 + $0x38] sm:$0xff]
          %v792 = vld [vmem:[#allocation2 + $0x40] sm:$0xff]
          %v793 = vld [vmem:[#allocation2 + $0x48] sm:$0xff]
          %v794 = vld [vmem:[#allocation2 + $0x50] sm:$0xff]
          %v795 = vld [vmem:[#allocation2 + $0x58] sm:$0xff]
          %v796 = vld [vmem:[#allocation2 + $0x60] sm:$0xff]
          %v797 = vld [vmem:[#allocation2 + $0x68] sm:$0xff]
          %v798 = vld [vmem:[#allocation2 + $0x70] sm:$0xff]
          %v799 = vld [vmem:[#allocation2 + $0x78] sm:$0xff]
          %v800 = vadd.f32 %v768, %v784
          %v801 = vadd.f32 %v769, %v785
          %v802 = vadd.f32 %v770, %v786
          %v803 = vadd.f32 %v771, %v787
          %v804 = vadd.f32 %v772, %v788
          %v805 = vadd.f32 %v773, %v789
          %v806 = vadd.f32 %v774, %v790
          %v807 = vadd.f32 %v775, %v791
          %v808 = vadd.f32 %v776, %v792
          %v809 = vadd.f32 %v777, %v793
          %v810 = vadd.f32 %v778, %v794
          %v811 = vadd.f32 %v779, %v795
          %v812 = vadd.f32 %v780, %v796
          %v813 = vadd.f32 %v781, %v797
          %v814 = vadd.f32 %v782, %v798
          %v815 = vadd.f32 %v783, %v799
          %816 = vst [vmem:[%s372] sm:$0xff] %v800
          %817 = vst [vmem:[%s372 + $0x8] sm:$0xff] %v801
          %818 = vst [vmem:[%s372 + $0x10] sm:$0xff] %v802
          %819 = vst [vmem:[%s372 + $0x18] sm:$0xff] %v803
          %820 = vst [vmem:[%s372 + $0x20] sm:$0xff] %v804
          %821 = vst [vmem:[%s372 + $0x28] sm:$0xff] %v805
          %822 = vst [vmem:[%s372 + $0x30] sm:$0xff] %v806
          %823 = vst [vmem:[%s372 + $0x38] sm:$0xff] %v807
          %824 = vst [vmem:[%s372 + $0x40] sm:$0xff] %v808
          %825 = vst [vmem:[%s372 + $0x48] sm:$0xff] %v809
          %826 = vst [vmem:[%s372 + $0x50] sm:$0xff] %v810
          %827 = vst [vmem:[%s372 + $0x58] sm:$0xff] %v811
          %828 = vst [vmem:[%s372 + $0x60] sm:$0xff] %v812
          %829 = vst [vmem:[%s372 + $0x68] sm:$0xff] %v813
          %830 = vst [vmem:[%s372 + $0x70] sm:$0xff] %v814
          %831 = vst [vmem:[%s372 + $0x78] sm:$0xff] %v815
        $region81: #{lightgcn_forward.6} parent=68 // pred_fallthru
          _
        %s832 = sand.u32 %s119, 1
        %s833 = scalar_lea.sflag [#allocation5], %s832
        %s834 = sand.u32 %s119, 1
        %s835 = smul.addr %s834, 64
        %s836 = scalar_lea.vmem [#allocation4], %s835
        %s837 = smul.u32 16, %s23
        %p838 = scmp.lt.s32.totalorder %s837, 31
        %s839 = scalar_select %p838, %s837, 31
        %s840 = smul.addr %s839, 8
        %s841 = scalar_lea.vmem %s4, %s840
        // Predicated region
        $region82: #{lightgcn_forward.6} parent=68 // pred_check
          %p842 = pneg %p129
        $region83: #{lightgcn_forward.6} parent=68 // pred_check_branch
          %844 = sbr.rel (%p842) target = $region85
        $region84: #{lightgcn_forward.6} parent=68 // pred_region
          %s845 = smul.u32 16, %s23
          %s847 = ssub.s32 1024, 1024
          %848 = vsyncadd %s833, %s847
          %s849 = smul.addr %s845, 64
          %s850 = scalar_lea.hbm %s3, %s849
          %s851 = sshll.u32 %s836, 4
          %s852 = int_to_ptr.vmem [resolvable:$true] %s851
          %857 = dma.vmem_to_hbm [thread:$0]  %s852, 1024, %s850, %s833, 64, 64, 4
        $region85: #{lightgcn_forward.6} parent=68 // pred_fallthru
          _
        // Predicated region
        $region86: #{lightgcn_forward.6} parent=68 // pred_check
          %p858 = pneg %p155
        $region87: #{lightgcn_forward.6} parent=68 // pred_check_branch
          %860 = sbr.rel (%p858) target = $region89
        $region88: #{lightgcn_forward.6} parent=68 // pred_region
          %s861 = smul.u32 16, %s23
        $region89: #{lightgcn_forward.6} parent=68 // pred_fallthru
          _
      $region69: #{lightgcn_forward.6} parent=5 // pred_fallthru
        _
      %p862 = scmp.le.s32.totalorder 2, %s14
      // Predicated region
      $region90: #{lightgcn_forward.6} parent=5 // pred_check
        %p863 = pneg %p862
      $region91: #{lightgcn_forward.6} parent=5 // pred_check_branch
        %865 = sbr.rel (%p863) target = $region93
      $region92: #{lightgcn_forward.6} parent=5 // pred_region
        %s866 = ssub.s32 %s14, 2
        // Predicated region
        $region94: #{lightgcn_forward.6} parent=92 // pred_check
          %p867 = pneg %p135
        $region95: #{lightgcn_forward.6} parent=92 // pred_check_branch
          %869 = sbr.rel (%p867) target = $region97
        $region96: #{lightgcn_forward.6} parent=92 // pred_region
          %s870 = sand.u32 %s120, 1
          %s871 = scalar_lea.sflag [#allocation5], %s870
          %s872 = sand.u32 %s120, 1
          %s873 = smul.addr %s872, 64
          %s874 = scalar_lea.vmem [#allocation4], %s873
          %875 = dma.done %s871, 1024
        $region97: #{lightgcn_forward.6} parent=92 // pred_fallthru
          _
        // Predicated region
        $region98: #{lightgcn_forward.6} parent=92 // pred_check
          %p876 = pneg %p161
        $region99: #{lightgcn_forward.6} parent=92 // pred_check_branch
          %878 = sbr.rel (%p876) target = $region101
        $region100: #{lightgcn_forward.6} parent=92 // pred_region
          %s879 = smul.u32 16, %s25
          %p880 = scmp.lt.s32.totalorder %s879, 31
          %s881 = scalar_select %p880, %s879, 31
          %s882 = smul.addr %s881, 8
          %s883 = scalar_lea.vmem %s4, %s882
        $region101: #{lightgcn_forward.6} parent=92 // pred_fallthru
          _
      $region93: #{lightgcn_forward.6} parent=5 // pred_fallthru
        _
    $region6: #{lightgcn_forward.6} parent=1 // loop_footer
      %s18 = sadd.s32 1, %s14
    $region7: #{lightgcn_forward.6} parent=1 // loop_footer_branch
      %13 = sbr.rel target = $region3
    $region8: #{lightgcn_forward.6} parent=1 // loop_exit
      _
    %884 = vsyncpa [#allocation5], 1
    %s885 = scalar_lea.sflag [#allocation5], 1
    %886 = vsyncpa %s885, 1

// kernel: lightgcn_forward.4
$region0: #{lightgcn_forward.4}
  #allocation0 [shape = 'u32[]', space=smem, size = 0x4, offset = 0x4, fixed_abs, tag = 'smem constant byte address 0x4 - core index']
  #allocation1 [shape = 'u32[144,128]{1,0:T(1,128)}', space=vmem, size = 0x12000, scoped, tag = 'internal scratch']
  #allocation2 [shape = 'f32[128,128]{1,0:T(8,128)}', space=vmem, size = 0x10000, scoped, tag = 'scratch operand']
  %s0 = inlined_call_operand.vmem [shape: bf16[256,256], index: 0, kind: input, shape index: {}]
  %s1 = inlined_call_operand.vmem [shape: bf16[256,128], index: 1, kind: input, shape index: {}]
  %s2 = inlined_call_operand.vmem [shape: f32[256,128], index: 2, kind: input, shape index: {}, may-alias: {2,4}]
  %s3 = inlined_call_operand.vmem [shape: bf16[256,128], index: 3, kind: output, shape index: {0}]
  %s4 = inlined_call_operand.vmem [shape: f32[256,128], index: 4, kind: output, shape index: {1}, may-alias: {2,4}]
  %5 = xla_tuple %s3, %s4
  %s6 = sld [smem:[#allocation0]]
  $region102: #{lightgcn_forward.4} parent=0
    _
  %s8 = ssub.s32 1, %s6
  %s9 = scalar_select 0, %s8, %s6
  $region1: #{lightgcn_forward.4} parent=0
    #allocation3 [shape = 'u8[65536]{0}', space=vmem, size = 0x10000, scoped, tag = 'input window, operand 0']
    loop: start=0, step=1, limit=6
    $region2: #{lightgcn_forward.4} parent=1 // loop_pre_header
      _
    $region3: #{lightgcn_forward.4} parent=1 // loop_header
      %s11 = sphi 0, %s15
      %p12 = scmp.ge.s32.totalorder %s11, 6
      %s18 = sphi 0, %s30
      %s19 = sphi 0, %s26
      %s20 = sphi 0, %s18
      %s21 = sphi 0, %s19
      %s22 = sphi 0, %s20
      %s23 = sphi 0, %s21
      %s35 = sphi 0, %s37
      %s38 = sphi 0, %s35
      %s39 = sphi 0, %s38
      %s55 = sphi 0, %s39
      %s61 = sphi 0, %s63
      %s64 = sphi 0, %s61
      %s65 = sphi 0, %s64
      %s81 = sphi 0, %s65
      %s87 = sphi 0, %s89
      %s90 = sphi 0, %s87
      %s91 = sphi 0, %s90
      %s107 = sphi 0, %s91
      %s113 = sphi 0, %s115
      %s116 = sphi 0, %s113
      %s117 = sphi 0, %s116
      %s133 = sphi 0, %s117
      %s139 = sphi 0, %s141
      %s142 = sphi 0, %s139
      %s143 = sphi 0, %s142
      %s159 = sphi 0, %s143
    $region4: #{lightgcn_forward.4} parent=1 // loop_header_branch
      %14 = sbr.rel (%p12) target = $region8
    $region5: #{lightgcn_forward.4} parent=1 // loop_body
      %s16 = ssub.s32 %s11, 1
      %s17 = ssub.s32 %s11, 2
      %s24 = sadd.s32 1, %s19
      %p25 = scmp.ge.s32.totalorder %s24, 2
      %s26 = scalar_select %p25, 0, %s24
      %s27 = sadd.s32 1, %s18
      %s28 = scalar_select %p25, %s27, %s18
      %p29 = scmp.ge.s32.totalorder %s28, 2
      %s30 = scalar_select %p29, 0, %s28
      %s31 = ssub.s32 %s18, %s30
      %s32 = ssub.s32 %s19, %s26
      %s33 = sor.u32 %s31, %s32
      %p34 = scmp.eq.s32.totalorder %s33, 0
      %s36 = sadd.s32 %s35, 1
      %s37 = scalar_select %p34, %s35, %s36
      %p40 = pneg %p34
      %p41 = scmp.eq.s32.totalorder %s11, 3
      %p42 = por %p40, %p41
      %p43 = scmp.ne.s32.totalorder %s35, %s38
      %p44 = scmp.eq.s32.totalorder %s11, 0
      %p45 = por %p43, %p44
      %p46 = scmp.ne.s32.totalorder %s35, %s38
      %p47 = scmp.eq.s32.totalorder %s16, 3
      %p48 = por %p46, %p47
      %p49 = scmp.ne.s32.totalorder %s38, %s39
      %p50 = scmp.eq.s32.totalorder %s16, 0
      %p51 = por %p49, %p50
      %p52 = scmp.ne.s32.totalorder %s38, %s39
      %p53 = scmp.eq.s32.totalorder %s17, 3
      %p54 = por %p52, %p53
      %p56 = scmp.ne.s32.totalorder %s39, %s55
      %p57 = scmp.eq.s32.totalorder %s17, 0
      %p58 = por %p56, %p57
      %s59 = ssub.s32 %s19, %s26
      %p60 = scmp.eq.s32.totalorder %s59, 0
      %s62 = sadd.s32 %s61, 1
      %s63 = scalar_select %p60, %s61, %s62
      %p66 = pneg %p60
      %p67 = scmp.eq.s32.totalorder %s11, 3
      %p68 = por %p66, %p67
      %p69 = scmp.ne.s32.totalorder %s61, %s64
      %p70 = scmp.eq.s32.totalorder %s11, 0
      %p71 = por %p69, %p70
      %p72 = scmp.ne.s32.totalorder %s61, %s64
      %p73 = scmp.eq.s32.totalorder %s16, 3
      %p74 = por %p72, %p73
      %p75 = scmp.ne.s32.totalorder %s64, %s65
      %p76 = scmp.eq.s32.totalorder %s16, 0
      %p77 = por %p75, %p76
      %p78 = scmp.ne.s32.totalorder %s64, %s65
      %p79 = scmp.eq.s32.totalorder %s17, 3
      %p80 = por %p78, %p79
      %p82 = scmp.ne.s32.totalorder %s65, %s81
      %p83 = scmp.eq.s32.totalorder %s17, 0
      %p84 = por %p82, %p83
      %s85 = ssub.s32 %s18, %s30
      %p86 = scmp.eq.s32.totalorder %s85, 0
      %s88 = sadd.s32 %s87, 1
      %s89 = scalar_select %p86, %s87, %s88
      %p92 = pneg %p86
      %p93 = scmp.eq.s32.totalorder %s11, 3
      %p94 = por %p92, %p93
      %p95 = scmp.ne.s32.totalorder %s87, %s90
      %p96 = scmp.eq.s32.totalorder %s11, 0
      %p97 = por %p95, %p96
      %p98 = scmp.ne.s32.totalorder %s87, %s90
      %p99 = scmp.eq.s32.totalorder %s16, 3
      %p100 = por %p98, %p99
      %p101 = scmp.ne.s32.totalorder %s90, %s91
      %p102 = scmp.eq.s32.totalorder %s16, 0
      %p103 = por %p101, %p102
      %p104 = scmp.ne.s32.totalorder %s90, %s91
      %p105 = scmp.eq.s32.totalorder %s17, 3
      %p106 = por %p104, %p105
      %p108 = scmp.ne.s32.totalorder %s91, %s107
      %p109 = scmp.eq.s32.totalorder %s17, 0
      %p110 = por %p108, %p109
      %s111 = ssub.s32 %s18, %s30
      %p112 = scmp.eq.s32.totalorder %s111, 0
      %s114 = sadd.s32 %s113, 1
      %s115 = scalar_select %p112, %s113, %s114
      %p118 = pneg %p112
      %p119 = scmp.eq.s32.totalorder %s11, 3
      %p120 = por %p118, %p119
      %p121 = scmp.ne.s32.totalorder %s113, %s116
      %p122 = scmp.eq.s32.totalorder %s11, 0
      %p123 = por %p121, %p122
      %p124 = scmp.ne.s32.totalorder %s113, %s116
      %p125 = scmp.eq.s32.totalorder %s16, 3
      %p126 = por %p124, %p125
      %p127 = scmp.ne.s32.totalorder %s116, %s117
      %p128 = scmp.eq.s32.totalorder %s16, 0
      %p129 = por %p127, %p128
      %p130 = scmp.ne.s32.totalorder %s116, %s117
      %p131 = scmp.eq.s32.totalorder %s17, 3
      %p132 = por %p130, %p131
      %p134 = scmp.ne.s32.totalorder %s117, %s133
      %p135 = scmp.eq.s32.totalorder %s17, 0
      %p136 = por %p134, %p135
      %s137 = ssub.s32 %s18, %s30
      %p138 = scmp.eq.s32.totalorder %s137, 0
      %s140 = sadd.s32 %s139, 1
      %s141 = scalar_select %p138, %s139, %s140
      %p144 = pneg %p138
      %p145 = scmp.eq.s32.totalorder %s11, 3
      %p146 = por %p144, %p145
      %p147 = scmp.ne.s32.totalorder %s139, %s142
      %p148 = scmp.eq.s32.totalorder %s11, 0
      %p149 = por %p147, %p148
      %p150 = scmp.ne.s32.totalorder %s139, %s142
      %p151 = scmp.eq.s32.totalorder %s16, 3
      %p152 = por %p150, %p151
      %p153 = scmp.ne.s32.totalorder %s142, %s143
      %p154 = scmp.eq.s32.totalorder %s16, 0
      %p155 = por %p153, %p154
      %p156 = scmp.ne.s32.totalorder %s142, %s143
      %p157 = scmp.eq.s32.totalorder %s17, 3
      %p158 = por %p156, %p157
      %p160 = scmp.ne.s32.totalorder %s143, %s159
      %p161 = scmp.eq.s32.totalorder %s17, 0
      %p162 = por %p160, %p161
      %p163 = scmp.le.s32.totalorder 1, %s11
      %p164 = scmp.lt.s32.totalorder %s11, 5
      %p165 = pnand %p163, %p164
      %p166 = pneg %p165
      // Predicated region
      $region9: #{lightgcn_forward.4} parent=5 // pred_check
        _
      $region10: #{lightgcn_forward.4} parent=5 // pred_check_branch
        %168 = sbr.rel (%p165) target = $region12
      $region11: #{lightgcn_forward.4} parent=5 // pred_region
        %s169 = ssub.s32 %s11, 1
      $region12: #{lightgcn_forward.4} parent=5 // pred_fallthru
        _
      %p170 = scmp.lt.s32.totalorder %s11, 4
      // Predicated region
      $region13: #{lightgcn_forward.4} parent=5 // pred_check
        %p171 = pneg %p170
      $region14: #{lightgcn_forward.4} parent=5 // pred_check_branch
        %173 = sbr.rel (%p171) target = $region16
      $region15: #{lightgcn_forward.4} parent=5 // pred_region
        // Predicated region
        $region17: #{lightgcn_forward.4} parent=15 // pred_check
          %p174 = pneg %p45
        $region18: #{lightgcn_forward.4} parent=15 // pred_check_branch
          %176 = sbr.rel (%p174) target = $region20
        $region19: #{lightgcn_forward.4} parent=15 // pred_region
          %s177 = sand.u32 %s35, 1
          %s178 = sand.u32 %s35, 1
          %s179 = smul.addr %s178, 64
          %s180 = scalar_lea.vmem [#allocation3], %s179
          %s181 = smul.u32 16, %s18
          %s182 = smul.addr %s181, 2
          %s183 = sadd.s32 %s19, %s182
          %s184 = smul.addr %s183, 4
          %s185 = scalar_lea.vmem %s0, %s184
          // Predicated region
          $region21: #{lightgcn_forward.4} parent=19 // pred_check
            _
          $region22: #{lightgcn_forward.4} parent=19 // pred_check_branch
            %187 = sbr.rel (0) target = $region24
          $region23: #{lightgcn_forward.4} parent=19 // pred_region
            // Predicated region
            $region25: #{lightgcn_forward.4} parent=23 // pred_check
              _
            $region26: #{lightgcn_forward.4} parent=23 // pred_check_branch
              %189 = sbr.rel target = $region28
            $region27: #{lightgcn_forward.4} parent=23 // pred_region
              // Predicated region
              $region40: #{lightgcn_forward.4} parent=27 // pred_check
                _
              $region41: #{lightgcn_forward.4} parent=27 // pred_check_branch
                %234 = sbr.rel (0) target = $region43
              $region42: #{lightgcn_forward.4} parent=27 // pred_region
                loop: start=0, step=1, limit=1
                $region44: #{lightgcn_forward.4} parent=42 // loop_pre_header
                  _
                $region45: #{lightgcn_forward.4} parent=42 // loop_header
                  %s236 = sphi 0, %s240
                  %p237 = scmp.ge.s32.totalorder %s236, 1
                  %s241 = sphi %s185, %s185
                  %s242 = sphi %s180, %s180
                $region46: #{lightgcn_forward.4} parent=42 // loop_header_branch
                  %239 = sbr.rel (%p237) target = $region50
                $region47: #{lightgcn_forward.4} parent=42 // loop_body
                  _
                $region48: #{lightgcn_forward.4} parent=42 // loop_footer
                  %s240 = sadd.s32 1, %s236
                $region49: #{lightgcn_forward.4} parent=42 // loop_footer_branch
                  %235 = sbr.rel target = $region45
                $region50: #{lightgcn_forward.4} parent=42 // loop_exit
                  _
                loop: start=0, step=1, limit=1
                $region51: #{lightgcn_forward.4} parent=42 // loop_pre_header
                  _
                $region52: #{lightgcn_forward.4} parent=42 // loop_header
                  %s245 = sphi 0, %s249
                  %p246 = scmp.ge.s32.totalorder %s245, 1
                  %s250 = sphi %s185, %s185
                  %s251 = sphi %s180, %s180
                $region53: #{lightgcn_forward.4} parent=42 // loop_header_branch
                  %248 = sbr.rel (%p246) target = $region57
                $region54: #{lightgcn_forward.4} parent=42 // loop_body
                  %v252 = vld [vmem:[%s250] sm:$0xf]
                  %253 = vst [vmem:[%s251] sm:$0xf] %v252
                  %v254 = vld [vmem:[%s250 + $0x8] sm:$0xf]
                  %255 = vst [vmem:[%s251 + $0x4] sm:$0xf] %v254
                  %v256 = vld [vmem:[%s250 + $0x10] sm:$0xf]
                  %257 = vst [vmem:[%s251 + $0x8] sm:$0xf] %v256
                  %v258 = vld [vmem:[%s250 + $0x18] sm:$0xf]
                  %259 = vst [vmem:[%s251 + $0xc] sm:$0xf] %v258
                  %v260 = vld [vmem:[%s250 + $0x20] sm:$0xf]
                  %261 = vst [vmem:[%s251 + $0x10] sm:$0xf] %v260
                  %v262 = vld [vmem:[%s250 + $0x28] sm:$0xf]
                  %263 = vst [vmem:[%s251 + $0x14] sm:$0xf] %v262
                  %v264 = vld [vmem:[%s250 + $0x30] sm:$0xf]
                  %265 = vst [vmem:[%s251 + $0x18] sm:$0xf] %v264
                  %v266 = vld [vmem:[%s250 + $0x38] sm:$0xf]
                  %267 = vst [vmem:[%s251 + $0x1c] sm:$0xf] %v266
                  %v268 = vld [vmem:[%s250 + $0x40] sm:$0xf]
                  %269 = vst [vmem:[%s251 + $0x20] sm:$0xf] %v268
                  %v270 = vld [vmem:[%s250 + $0x48] sm:$0xf]
                  %271 = vst [vmem:[%s251 + $0x24] sm:$0xf] %v270
                  %v272 = vld [vmem:[%s250 + $0x50] sm:$0xf]
                  %273 = vst [vmem:[%s251 + $0x28] sm:$0xf] %v272
                  %v274 = vld [vmem:[%s250 + $0x58] sm:$0xf]
                  %275 = vst [vmem:[%s251 + $0x2c] sm:$0xf] %v274
                  %v276 = vld [vmem:[%s250 + $0x60] sm:$0xf]
                  %277 = vst [vmem:[%s251 + $0x30] sm:$0xf] %v276
                  %v278 = vld [vmem:[%s250 + $0x68] sm:$0xf]
                  %279 = vst [vmem:[%s251 + $0x34] sm:$0xf] %v278
                  %v280 = vld [vmem:[%s250 + $0x70] sm:$0xf]
                  %281 = vst [vmem:[%s251 + $0x38] sm:$0xf] %v280
                  %v282 = vld [vmem:[%s250 + $0x78] sm:$0xf]
                  %283 = vst [vmem:[%s251 + $0x3c] sm:$0xf] %v282
                $region55: #{lightgcn_forward.4} parent=42 // loop_footer
                  %s249 = sadd.s32 1, %s245
                $region56: #{lightgcn_forward.4} parent=42 // loop_footer_branch
                  %244 = sbr.rel target = $region52
                $region57: #{lightgcn_forward.4} parent=42 // loop_exit
                  _
              $region43: #{lightgcn_forward.4} parent=27 // pred_fallthru
                _
            $region28: #{lightgcn_forward.4} parent=23 // pred_fallthru
              _
            // Predicated region
            $region29: #{lightgcn_forward.4} parent=23 // pred_check
              _
            $region30: #{lightgcn_forward.4} parent=23 // pred_check_branch
              %191 = sbr.rel (0) target = $region32
            $region31: #{lightgcn_forward.4} parent=23 // pred_region
              loop: start=0, step=1, limit=1
              $region33: #{lightgcn_forward.4} parent=31 // loop_pre_header
                _
              $region34: #{lightgcn_forward.4} parent=31 // loop_header
                %s194 = sphi 0, %s198
                %p195 = scmp.ge.s32.totalorder %s194, 1
                %s199 = sphi %s185, %s185
                %s200 = sphi %s180, %s180
              $region35: #{lightgcn_forward.4} parent=31 // loop_header_branch
                %197 = sbr.rel (%p195) target = $region39
              $region36: #{lightgcn_forward.4} parent=31 // loop_body
                %v201 = vld [vmem:[%s199] sm:$0xf]
                %202 = vst [vmem:[%s200] sm:$0xf] %v201
                %v203 = vld [vmem:[%s199 + $0x8] sm:$0xf]
                %204 = vst [vmem:[%s200 + $0x4] sm:$0xf] %v203
                %v205 = vld [vmem:[%s199 + $0x10] sm:$0xf]
                %206 = vst [vmem:[%s200 + $0x8] sm:$0xf] %v205
                %v207 = vld [vmem:[%s199 + $0x18] sm:$0xf]
                %208 = vst [vmem:[%s200 + $0xc] sm:$0xf] %v207
                %v209 = vld [vmem:[%s199 + $0x20] sm:$0xf]
                %210 = vst [vmem:[%s200 + $0x10] sm:$0xf] %v209
                %v211 = vld [vmem:[%s199 + $0x28] sm:$0xf]
                %212 = vst [vmem:[%s200 + $0x14] sm:$0xf] %v211
                %v213 = vld [vmem:[%s199 + $0x30] sm:$0xf]
                %214 = vst [vmem:[%s200 + $0x18] sm:$0xf] %v213
                %v215 = vld [vmem:[%s199 + $0x38] sm:$0xf]
                %216 = vst [vmem:[%s200 + $0x1c] sm:$0xf] %v215
                %v217 = vld [vmem:[%s199 + $0x40] sm:$0xf]
                %218 = vst [vmem:[%s200 + $0x20] sm:$0xf] %v217
                %v219 = vld [vmem:[%s199 + $0x48] sm:$0xf]
                %220 = vst [vmem:[%s200 + $0x24] sm:$0xf] %v219
                %v221 = vld [vmem:[%s199 + $0x50] sm:$0xf]
                %222 = vst [vmem:[%s200 + $0x28] sm:$0xf] %v221
                %v223 = vld [vmem:[%s199 + $0x58] sm:$0xf]
                %224 = vst [vmem:[%s200 + $0x2c] sm:$0xf] %v223
                %v225 = vld [vmem:[%s199 + $0x60] sm:$0xf]
                %226 = vst [vmem:[%s200 + $0x30] sm:$0xf] %v225
                %v227 = vld [vmem:[%s199 + $0x68] sm:$0xf]
                %228 = vst [vmem:[%s200 + $0x34] sm:$0xf] %v227
                %v229 = vld [vmem:[%s199 + $0x70] sm:$0xf]
                %230 = vst [vmem:[%s200 + $0x38] sm:$0xf] %v229
                %v231 = vld [vmem:[%s199 + $0x78] sm:$0xf]
                %232 = vst [vmem:[%s200 + $0x3c] sm:$0xf] %v231
              $region37: #{lightgcn_forward.4} parent=31 // loop_footer
                %s198 = sadd.s32 1, %s194
              $region38: #{lightgcn_forward.4} parent=31 // loop_footer_branch
                %193 = sbr.rel target = $region34
              $region39: #{lightgcn_forward.4} parent=31 // loop_exit
                _
            $region32: #{lightgcn_forward.4} parent=23 // pred_fallthru
              _
          $region24: #{lightgcn_forward.4} parent=19 // pred_fallthru
            _
          %284 = vnop
        $region20: #{lightgcn_forward.4} parent=15 // pred_fallthru
          _
        // Predicated region
        $region58: #{lightgcn_forward.4} parent=15 // pred_check
          %p285 = pneg %p71
        $region59: #{lightgcn_forward.4} parent=15 // pred_check_branch
          %287 = sbr.rel (%p285) target = $region61
        $region60: #{lightgcn_forward.4} parent=15 // pred_region
          %s288 = smul.u32 16, %s19
          %p289 = scmp.lt.s32.totalorder %s288, 31
          %s290 = scalar_select %p289, %s288, 31
          %s291 = smul.addr %s290, 4
          %s292 = scalar_lea.vmem %s1, %s291
          %s293 = smul.u32 16, %s19
        $region61: #{lightgcn_forward.4} parent=15 // pred_fallthru
          _
        // Predicated region
        $region62: #{lightgcn_forward.4} parent=15 // pred_check
          %p294 = pneg %p97
        $region63: #{lightgcn_forward.4} parent=15 // pred_check_branch
          %296 = sbr.rel (%p294) target = $region65
        $region64: #{lightgcn_forward.4} parent=15 // pred_region
          %s297 = smul.u32 16, %s18
          %p298 = scmp.lt.s32.totalorder %s297, 31
          %s299 = scalar_select %p298, %s297, 31
          %s300 = smul.addr %s299, 8
          %s301 = scalar_lea.vmem %s2, %s300
          %s302 = smul.u32 16, %s18
        $region65: #{lightgcn_forward.4} parent=15 // pred_fallthru
          _
      $region16: #{lightgcn_forward.4} parent=5 // pred_fallthru
        _
      %p303 = scmp.le.s32.totalorder 1, %s11
      %p304 = scmp.lt.s32.totalorder %s11, 5
      %p305 = pnand %p303, %p304
      %p306 = pneg %p305
      // Predicated region
      $region66: #{lightgcn_forward.4} parent=5 // pred_check
        _
      $region67: #{lightgcn_forward.4} parent=5 // pred_check_branch
        %308 = sbr.rel (%p305) target = $region69
      $region68: #{lightgcn_forward.4} parent=5 // pred_region
        %s309 = ssub.s32 %s11, 1
        %s310 = sand.u32 %s38, 1
        %s311 = sand.u32 %s38, 1
        %s312 = smul.addr %s311, 64
        %s313 = scalar_lea.vmem [#allocation3], %s312
        // Predicated region
        $region70: #{lightgcn_forward.4} parent=68 // pred_check
          %p314 = pneg %p51
        $region71: #{lightgcn_forward.4} parent=68 // pred_check_branch
          %316 = sbr.rel (%p314) target = $region73
        $region72: #{lightgcn_forward.4} parent=68 // pred_region
          _
        $region73: #{lightgcn_forward.4} parent=68 // pred_fallthru
          _
        %s317 = sand.u32 %s38, 1
        %s318 = sand.u32 %s38, 1
        %s319 = smul.addr %s318, 64
        %s320 = scalar_lea.vmem [#allocation3], %s319
        %p321 = pneg %p51
        %p322 = pneg %p48
        %s323 = smul.u32 16, %s21
        %p324 = scmp.lt.s32.totalorder %s323, 31
        %s325 = scalar_select %p324, %s323, 31
        %s326 = smul.addr %s325, 4
        %s327 = scalar_lea.vmem %s1, %s326
        %p328 = pneg %p77
        %p329 = pneg %p74
        %s330 = smul.u32 16, %s20
        %p331 = scmp.lt.s32.totalorder %s330, 31
        %s332 = scalar_select %p331, %s330, 31
        %s333 = smul.addr %s332, 8
        %s334 = scalar_lea.vmem %s2, %s333
        %p335 = pneg %p103
        %p336 = pneg %p100
        %p337 = pneg %p129
        %p338 = pneg %p126
        %s339 = smul.u32 16, %s20
        %p340 = scmp.lt.s32.totalorder %s339, 31
        %s341 = scalar_select %p340, %s339, 31
        %s342 = smul.addr %s341, 4
        %s343 = scalar_lea.vmem %s3, %s342
        %p344 = pneg %p155
        %p345 = pneg %p152
        %s346 = smul.u32 16, %s20
        %p347 = scmp.lt.s32.totalorder %s346, 31
        %s348 = scalar_select %p347, %s346, 31
        %s349 = smul.addr %s348, 8
        %s350 = scalar_lea.vmem %s4, %s349
        %s351 = smul.u32 16, %s20
        %s352 = smul.u32 16, %s21
        %p353 = scmp.lt.s32.totalorder %s352, 31
        %s354 = scalar_select %p353, %s352, 31
        %s355 = smul.addr %s354, 4
        %s356 = scalar_lea.vmem %s1, %s355
        %s357 = smul.u32 16, %s21
        %s358 = smul.u32 16, %s20
        %p359 = scmp.lt.s32.totalorder %s358, 31
        %s360 = scalar_select %p359, %s358, 31
        %s361 = smul.addr %s360, 8
        %s362 = scalar_lea.vmem %s2, %s361
        %s363 = smul.u32 16, %s20
        %s364 = smul.u32 16, %s20
        %p365 = scmp.lt.s32.totalorder %s364, 31
        %s366 = scalar_select %p365, %s364, 31
        %s367 = smul.addr %s366, 4
        %s368 = scalar_lea.vmem %s3, %s367
        %s369 = smul.u32 16, %s20
        %s370 = smul.u32 16, %s20
        %p371 = scmp.lt.s32.totalorder %s370, 31
        %s372 = scalar_select %p371, %s370, 31
        %s373 = smul.addr %s372, 8
        %s374 = scalar_lea.vmem %s4, %s373
        %s375 = smul.u32 16, %s20
        %p377 = scmp.eq.s32.totalorder %s21, 0
        // Predicated region
        $region74: #{lightgcn_forward.4} parent=68 // pred_check
          %p378 = pneg %p377
        $region75: #{lightgcn_forward.4} parent=68 // pred_check_branch
          %380 = sbr.rel (%p378) target = $region77
        $region76: #{lightgcn_forward.4} parent=68 // pred_region
          %381 = vst [vmem:[#allocation2] sm:$0xff] 0.0
          %382 = vst [vmem:[#allocation2 + $0x8] sm:$0xff] 0.0
          %383 = vst [vmem:[#allocation2 + $0x10] sm:$0xff] 0.0
          %384 = vst [vmem:[#allocation2 + $0x18] sm:$0xff] 0.0
          %385 = vst [vmem:[#allocation2 + $0x20] sm:$0xff] 0.0
          %386 = vst [vmem:[#allocation2 + $0x28] sm:$0xff] 0.0
          %387 = vst [vmem:[#allocation2 + $0x30] sm:$0xff] 0.0
          %388 = vst [vmem:[#allocation2 + $0x38] sm:$0xff] 0.0
          %389 = vst [vmem:[#allocation2 + $0x40] sm:$0xff] 0.0
          %390 = vst [vmem:[#allocation2 + $0x48] sm:$0xff] 0.0
          %391 = vst [vmem:[#allocation2 + $0x50] sm:$0xff] 0.0
          %392 = vst [vmem:[#allocation2 + $0x58] sm:$0xff] 0.0
          %393 = vst [vmem:[#allocation2 + $0x60] sm:$0xff] 0.0
          %394 = vst [vmem:[#allocation2 + $0x68] sm:$0xff] 0.0
          %395 = vst [vmem:[#allocation2 + $0x70] sm:$0xff] 0.0
          %396 = vst [vmem:[#allocation2 + $0x78] sm:$0xff] 0.0
        $region77: #{lightgcn_forward.4} parent=68 // pred_fallthru
          _
        %v397 = vld [vmem:[#allocation2] sm:$0xff]
        %v398 = vld [vmem:[#allocation2 + $0x8] sm:$0xff]
        %v399 = vld [vmem:[#allocation2 + $0x10] sm:$0xff]
        %v400 = vld [vmem:[#allocation2 + $0x18] sm:$0xff]
        %v401 = vld [vmem:[#allocation2 + $0x20] sm:$0xff]
        %v402 = vld [vmem:[#allocation2 + $0x28] sm:$0xff]
        %v403 = vld [vmem:[#allocation2 + $0x30] sm:$0xff]
        %v404 = vld [vmem:[#allocation2 + $0x38] sm:$0xff]
        %v405 = vld [vmem:[#allocation2 + $0x40] sm:$0xff]
        %v406 = vld [vmem:[#allocation2 + $0x48] sm:$0xff]
        %v407 = vld [vmem:[#allocation2 + $0x50] sm:$0xff]
        %v408 = vld [vmem:[#allocation2 + $0x58] sm:$0xff]
        %v409 = vld [vmem:[#allocation2 + $0x60] sm:$0xff]
        %v410 = vld [vmem:[#allocation2 + $0x68] sm:$0xff]
        %v411 = vld [vmem:[#allocation2 + $0x70] sm:$0xff]
        %v412 = vld [vmem:[#allocation2 + $0x78] sm:$0xff]
        %v413 = vld [vmem:[%s313] sm:$0xf]
        %v414 = vld [vmem:[%s313 + $0x4] sm:$0xf]
        %v415 = vld [vmem:[%s313 + $0x8] sm:$0xf]
        %v416 = vld [vmem:[%s313 + $0xc] sm:$0xf]
        %v417 = vld [vmem:[%s313 + $0x10] sm:$0xf]
        %v418 = vld [vmem:[%s313 + $0x14] sm:$0xf]
        %v419 = vld [vmem:[%s313 + $0x18] sm:$0xf]
        %v420 = vld [vmem:[%s313 + $0x1c] sm:$0xf]
        %v421 = vld [vmem:[%s313 + $0x20] sm:$0xf]
        %v422 = vld [vmem:[%s313 + $0x24] sm:$0xf]
        %v423 = vld [vmem:[%s313 + $0x28] sm:$0xf]
        %v424 = vld [vmem:[%s313 + $0x2c] sm:$0xf]
        %v425 = vld [vmem:[%s313 + $0x30] sm:$0xf]
        %v426 = vld [vmem:[%s313 + $0x34] sm:$0xf]
        %v427 = vld [vmem:[%s313 + $0x38] sm:$0xf]
        %v428 = vld [vmem:[%s313 + $0x3c] sm:$0xf]
        %v429 = vld [vmem:[%s356] sm:$0xf]
        %v430 = vld [vmem:[%s356 + $0x4] sm:$0xf]
        %v431 = vld [vmem:[%s356 + $0x8] sm:$0xf]
        %v432 = vld [vmem:[%s356 + $0xc] sm:$0xf]
        %v433 = vld [vmem:[%s356 + $0x10] sm:$0xf]
        %v434 = vld [vmem:[%s356 + $0x14] sm:$0xf]
        %v435 = vld [vmem:[%s356 + $0x18] sm:$0xf]
        %v436 = vld [vmem:[%s356 + $0x1c] sm:$0xf]
        %v437 = vld [vmem:[%s356 + $0x20] sm:$0xf]
        %v438 = vld [vmem:[%s356 + $0x24] sm:$0xf]
        %v439 = vld [vmem:[%s356 + $0x28] sm:$0xf]
        %v440 = vld [vmem:[%s356 + $0x2c] sm:$0xf]
        %v441 = vld [vmem:[%s356 + $0x30] sm:$0xf]
        %v442 = vld [vmem:[%s356 + $0x34] sm:$0xf]
        %v443 = vld [vmem:[%s356 + $0x38] sm:$0xf]
        %v444 = vld [vmem:[%s356 + $0x3c] sm:$0xf]
        %v461 = vunpack.c.l.b16 %v413
        %v462 = vunpack.c.l.b16 %v414
        %v463 = vunpack.c.l.b16 %v415
        %v464 = vunpack.c.l.b16 %v416
        %v465 = vunpack.c.l.b16 %v417
        %v466 = vunpack.c.l.b16 %v418
        %v467 = vunpack.c.l.b16 %v419
        %v468 = vunpack.c.l.b16 %v420
        %v469 = vunpack.c.l.b16 %v421
        %v470 = vunpack.c.l.b16 %v422
        %v471 = vunpack.c.l.b16 %v423
        %v472 = vunpack.c.l.b16 %v424
        %v473 = vunpack.c.l.b16 %v425
        %v474 = vunpack.c.l.b16 %v426
        %v475 = vunpack.c.l.b16 %v427
        %v476 = vunpack.c.l.b16 %v428
        %v477 = vpack.c.b16 %v462, %v461
        %v478 = vpack.c.b16 %v464, %v463
        %v479 = vpack.c.b16 %v466, %v465
        %v480 = vpack.c.b16 %v468, %v467
        %v481 = vpack.c.b16 %v470, %v469
        %v482 = vpack.c.b16 %v472, %v471
        %v483 = vpack.c.b16 %v474, %v473
        %v484 = vpack.c.b16 %v476, %v475
        %v509 = vunpack.c.l.b16 %v429
        %v510 = vunpack.c.l.b16 %v430
        %v511 = vunpack.c.l.b16 %v431
        %v512 = vunpack.c.l.b16 %v432
        %v513 = vunpack.c.l.b16 %v433
        %v514 = vunpack.c.l.b16 %v434
        %v515 = vunpack.c.l.b16 %v435
        %v516 = vunpack.c.l.b16 %v436
        %v517 = vunpack.c.l.b16 %v437
        %v518 = vunpack.c.l.b16 %v438
        %v519 = vunpack.c.l.b16 %v439
        %v520 = vunpack.c.l.b16 %v440
        %v521 = vunpack.c.l.b16 %v441
        %v522 = vunpack.c.l.b16 %v442
        %v523 = vunpack.c.l.b16 %v443
        %v524 = vunpack.c.l.b16 %v444
        %v525 = vpack.c.b16 %v510, %v509
        %v526 = vpack.c.b16 %v512, %v511
        %v527 = vpack.c.b16 %v514, %v513
        %v528 = vpack.c.b16 %v516, %v515
        %v529 = vpack.c.b16 %v518, %v517
        %v530 = vpack.c.b16 %v520, %v519
        %v531 = vpack.c.b16 %v522, %v521
        %v532 = vpack.c.b16 %v524, %v523
        %541 = vmatprep.subr.bf16.mxu0 0
        %542 = vmatpush1.bf16.msra.mxu0 %v525
        %543 = vmatprep.subr.bf16.mxu0 0
        %544 = vmatpush1.bf16.msra.mxu0 %v526
        %545 = vmatprep.subr.bf16.mxu0 0
        %546 = vmatpush1.bf16.msra.mxu0 %v527
        %547 = vmatprep.subr.bf16.mxu0 0
        %548 = vmatpush1.bf16.msra.mxu0 %v528
        %549 = vmatprep.subr.bf16.mxu0 0
        %550 = vmatpush1.bf16.msra.mxu0 %v529
        %551 = vmatprep.subr.bf16.mxu0 0
        %552 = vmatpush1.bf16.msra.mxu0 %v530
        %553 = vmatprep.subr.bf16.mxu0 0
        %554 = vmatpush1.bf16.msra.mxu0 %v531
        %555 = vmatprep.subr.bf16.mxu0 0
        %556 = vmatpush1.bf16.msra.mxu0 %v532
        %557 = vmatprep.subr.bf16.mxu0 0
        %558 = vmatpush1.bf16.msra.mxu0 0
        %559 = vmatprep.subr.bf16.mxu0 0
        %560 = vmatpush1.bf16.msra.mxu0 0
        %561 = vmatprep.subr.bf16.mxu0 0
        %562 = vmatpush1.bf16.msra.mxu0 0
        %563 = vmatprep.subr.bf16.mxu0 0
        %564 = vmatpush1.bf16.msra.mxu0 0
        %565 = vmatprep.subr.bf16.mxu0 0
        %566 = vmatpush1.bf16.msra.mxu0 0
        %567 = vmatprep.subr.bf16.mxu0 0
        %568 = vmatpush1.bf16.msra.mxu0 0
        %569 = vmatprep.subr.bf16.mxu0 0
        %570 = vmatpush1.bf16.msra.mxu0 0
        %571 = vmatprep.subr.bf16.mxu0 0
        %572 = vmatpush1.bf16.msra.mxu0 0
        %573 = vmatprep.mubr.bf16.mxu0 0
        %574 = vmatmul.mubr.bf16.gmra.mrb[0].mxu0 %v477
        %v575 = vpop.f32.mrb[0].mxu0
        %v576 = vadd.f32 0.0, %v575
        %v577 = vpop.f32.mrb[0].mxu0
        %v578 = vpop.f32.mrb[0].mxu0
        %v579 = vadd.f32 0.0, %v578
        %v580 = vpop.f32.mrb[0].mxu0
        %581 = vmatprep.mubr.bf16.mxu0 0
        %582 = vmatmul.mubr.bf16.gmra.mrb[0].mxu0 %v478
        %v583 = vpop.f32.mrb[0].mxu0
        %v584 = vadd.f32 0.0, %v583
        %v585 = vpop.f32.mrb[0].mxu0
        %v586 = vpop.f32.mrb[0].mxu0
        %v587 = vadd.f32 0.0, %v586
        %v588 = vpop.f32.mrb[0].mxu0
        %589 = vmatprep.mubr.bf16.mxu0 0
        %590 = vmatmul.mubr.bf16.gmra.mrb[0].mxu0 %v479
        %v591 = vpop.f32.mrb[0].mxu0
        %v592 = vadd.f32 0.0, %v591
        %v593 = vpop.f32.mrb[0].mxu0
        %v594 = vpop.f32.mrb[0].mxu0
        %v595 = vadd.f32 0.0, %v594
        %v596 = vpop.f32.mrb[0].mxu0
        %597 = vmatprep.mubr.bf16.mxu0 0
        %598 = vmatmul.mubr.bf16.gmra.mrb[0].mxu0 %v480
        %v599 = vpop.f32.mrb[0].mxu0
        %v600 = vadd.f32 0.0, %v599
        %v601 = vpop.f32.mrb[0].mxu0
        %v602 = vpop.f32.mrb[0].mxu0
        %v603 = vadd.f32 0.0, %v602
        %v604 = vpop.f32.mrb[0].mxu0
        %605 = vmatprep.mubr.bf16.mxu0 0
        %606 = vmatmul.mubr.bf16.gmra.mrb[0].mxu0 %v481
        %v607 = vpop.f32.mrb[0].mxu0
        %v608 = vadd.f32 0.0, %v607
        %v609 = vpop.f32.mrb[0].mxu0
        %v610 = vpop.f32.mrb[0].mxu0
        %v611 = vadd.f32 0.0, %v610
        %v612 = vpop.f32.mrb[0].mxu0
        %613 = vmatprep.mubr.bf16.mxu0 0
        %614 = vmatmul.mubr.bf16.gmra.mrb[0].mxu0 %v482
        %v615 = vpop.f32.mrb[0].mxu0
        %v616 = vadd.f32 0.0, %v615
        %v617 = vpop.f32.mrb[0].mxu0
        %v618 = vpop.f32.mrb[0].mxu0
        %v619 = vadd.f32 0.0, %v618
        %v620 = vpop.f32.mrb[0].mxu0
        %621 = vmatprep.mubr.bf16.mxu0 0
        %622 = vmatmul.mubr.bf16.gmra.mrb[0].mxu0 %v483
        %v623 = vpop.f32.mrb[0].mxu0
        %v624 = vadd.f32 0.0, %v623
        %v625 = vpop.f32.mrb[0].mxu0
        %v626 = vpop.f32.mrb[0].mxu0
        %v627 = vadd.f32 0.0, %v626
        %v628 = vpop.f32.mrb[0].mxu0
        %629 = vmatprep.mubr.bf16.mxu0 0
        %630 = vmatmul.mubr.bf16.gmra.mrb[0].mxu0 %v484
        %v631 = vpop.f32.mrb[0].mxu0
        %v632 = vadd.f32 0.0, %v631
        %v633 = vpop.f32.mrb[0].mxu0
        %v634 = vpop.f32.mrb[0].mxu0
        %v635 = vadd.f32 0.0, %v634
        %v636 = vpop.f32.mrb[0].mxu0
        %637 = vdwg.mxu0
        %v638 = vadd.f32 %v397, %v576
        %v639 = vadd.f32 %v398, %v579
        %v640 = vadd.f32 %v399, %v584
        %v641 = vadd.f32 %v400, %v587
        %v642 = vadd.f32 %v401, %v592
        %v643 = vadd.f32 %v402, %v595
        %v644 = vadd.f32 %v403, %v600
        %v645 = vadd.f32 %v404, %v603
        %v646 = vadd.f32 %v405, %v608
        %v647 = vadd.f32 %v406, %v611
        %v648 = vadd.f32 %v407, %v616
        %v649 = vadd.f32 %v408, %v619
        %v650 = vadd.f32 %v409, %v624
        %v651 = vadd.f32 %v410, %v627
        %v652 = vadd.f32 %v411, %v632
        %v653 = vadd.f32 %v412, %v635
        %654 = vst [vmem:[#allocation2] sm:$0xff] %v638
        %655 = vst [vmem:[#allocation2 + $0x8] sm:$0xff] %v639
        %656 = vst [vmem:[#allocation2 + $0x10] sm:$0xff] %v640
        %657 = vst [vmem:[#allocation2 + $0x18] sm:$0xff] %v641
        %658 = vst [vmem:[#allocation2 + $0x20] sm:$0xff] %v642
        %659 = vst [vmem:[#allocation2 + $0x28] sm:$0xff] %v643
        %660 = vst [vmem:[#allocation2 + $0x30] sm:$0xff] %v644
        %661 = vst [vmem:[#allocation2 + $0x38] sm:$0xff] %v645
        %662 = vst [vmem:[#allocation2 + $0x40] sm:$0xff] %v646
        %663 = vst [vmem:[#allocation2 + $0x48] sm:$0xff] %v647
        %664 = vst [vmem:[#allocation2 + $0x50] sm:$0xff] %v648
        %665 = vst [vmem:[#allocation2 + $0x58] sm:$0xff] %v649
        %666 = vst [vmem:[#allocation2 + $0x60] sm:$0xff] %v650
        %667 = vst [vmem:[#allocation2 + $0x68] sm:$0xff] %v651
        %668 = vst [vmem:[#allocation2 + $0x70] sm:$0xff] %v652
        %669 = vst [vmem:[#allocation2 + $0x78] sm:$0xff] %v653
        %p670 = scmp.eq.s32.totalorder %s21, 1
        // Predicated region
        $region78: #{lightgcn_forward.4} parent=68 // pred_check
          %p671 = pneg %p670
        $region79: #{lightgcn_forward.4} parent=68 // pred_check_branch
          %673 = sbr.rel (%p671) target = $region81
        $region80: #{lightgcn_forward.4} parent=68 // pred_region
          %v674 = vld [vmem:[#allocation2] sm:$0xff]
          %v675 = vld [vmem:[#allocation2 + $0x8] sm:$0xff]
          %v676 = vld [vmem:[#allocation2 + $0x10] sm:$0xff]
          %v677 = vld [vmem:[#allocation2 + $0x18] sm:$0xff]
          %v678 = vld [vmem:[#allocation2 + $0x20] sm:$0xff]
          %v679 = vld [vmem:[#allocation2 + $0x28] sm:$0xff]
          %v680 = vld [vmem:[#allocation2 + $0x30] sm:$0xff]
          %v681 = vld [vmem:[#allocation2 + $0x38] sm:$0xff]
          %v682 = vld [vmem:[#allocation2 + $0x40] sm:$0xff]
          %v683 = vld [vmem:[#allocation2 + $0x48] sm:$0xff]
          %v684 = vld [vmem:[#allocation2 + $0x50] sm:$0xff]
          %v685 = vld [vmem:[#allocation2 + $0x58] sm:$0xff]
          %v686 = vld [vmem:[#allocation2 + $0x60] sm:$0xff]
          %v687 = vld [vmem:[#allocation2 + $0x68] sm:$0xff]
          %v688 = vld [vmem:[#allocation2 + $0x70] sm:$0xff]
          %v689 = vld [vmem:[#allocation2 + $0x78] sm:$0xff]
          %v690 = vpack.c.bf16 %v675, %v674
          %v691 = vpack.c.bf16 %v677, %v676
          %v692 = vpack.c.bf16 %v679, %v678
          %v693 = vpack.c.bf16 %v681, %v680
          %v694 = vpack.c.bf16 %v683, %v682
          %v695 = vpack.c.bf16 %v685, %v684
          %v696 = vpack.c.bf16 %v687, %v686
          %v697 = vpack.c.bf16 %v689, %v688
          %v706 = vunpack.c.l.b16 %v690
          %v707 = vunpack.c.h.b16 %v690
          %v708 = vunpack.c.l.b16 %v691
          %v709 = vunpack.c.h.b16 %v691
          %v710 = vunpack.c.l.b16 %v692
          %v711 = vunpack.c.h.b16 %v692
          %v712 = vunpack.c.l.b16 %v693
          %v713 = vunpack.c.h.b16 %v693
          %v714 = vunpack.c.l.b16 %v694
          %v715 = vunpack.c.h.b16 %v694
          %v716 = vunpack.c.l.b16 %v695
          %v717 = vunpack.c.h.b16 %v695
          %v718 = vunpack.c.l.b16 %v696
          %v719 = vunpack.c.h.b16 %v696
          %v720 = vunpack.c.l.b16 %v697
          %v721 = vunpack.c.h.b16 %v697
          %v722 = vpack.c.b16 %v706, %v706
          %v723 = vpack.c.b16 %v707, %v707
          %v724 = vpack.c.b16 %v708, %v708
          %v725 = vpack.c.b16 %v709, %v709
          %v726 = vpack.c.b16 %v710, %v710
          %v727 = vpack.c.b16 %v711, %v711
          %v728 = vpack.c.b16 %v712, %v712
          %v729 = vpack.c.b16 %v713, %v713
          %v730 = vpack.c.b16 %v714, %v714
          %v731 = vpack.c.b16 %v715, %v715
          %v732 = vpack.c.b16 %v716, %v716
          %v733 = vpack.c.b16 %v717, %v717
          %v734 = vpack.c.b16 %v718, %v718
          %v735 = vpack.c.b16 %v719, %v719
          %v736 = vpack.c.b16 %v720, %v720
          %v737 = vpack.c.b16 %v721, %v721
          %754 = vst [vmem:[%s368] sm:$0xf] %v722
          %755 = vst [vmem:[%s368 + $0x4] sm:$0xf] %v723
          %756 = vst [vmem:[%s368 + $0x8] sm:$0xf] %v724
          %757 = vst [vmem:[%s368 + $0xc] sm:$0xf] %v725
          %758 = vst [vmem:[%s368 + $0x10] sm:$0xf] %v726
          %759 = vst [vmem:[%s368 + $0x14] sm:$0xf] %v727
          %760 = vst [vmem:[%s368 + $0x18] sm:$0xf] %v728
          %761 = vst [vmem:[%s368 + $0x1c] sm:$0xf] %v729
          %762 = vst [vmem:[%s368 + $0x20] sm:$0xf] %v730
          %763 = vst [vmem:[%s368 + $0x24] sm:$0xf] %v731
          %764 = vst [vmem:[%s368 + $0x28] sm:$0xf] %v732
          %765 = vst [vmem:[%s368 + $0x2c] sm:$0xf] %v733
          %766 = vst [vmem:[%s368 + $0x30] sm:$0xf] %v734
          %767 = vst [vmem:[%s368 + $0x34] sm:$0xf] %v735
          %768 = vst [vmem:[%s368 + $0x38] sm:$0xf] %v736
          %769 = vst [vmem:[%s368 + $0x3c] sm:$0xf] %v737
          %v770 = vld [vmem:[%s362] sm:$0xff]
          %v771 = vld [vmem:[%s362 + $0x8] sm:$0xff]
          %v772 = vld [vmem:[%s362 + $0x10] sm:$0xff]
          %v773 = vld [vmem:[%s362 + $0x18] sm:$0xff]
          %v774 = vld [vmem:[%s362 + $0x20] sm:$0xff]
          %v775 = vld [vmem:[%s362 + $0x28] sm:$0xff]
          %v776 = vld [vmem:[%s362 + $0x30] sm:$0xff]
          %v777 = vld [vmem:[%s362 + $0x38] sm:$0xff]
          %v778 = vld [vmem:[%s362 + $0x40] sm:$0xff]
          %v779 = vld [vmem:[%s362 + $0x48] sm:$0xff]
          %v780 = vld [vmem:[%s362 + $0x50] sm:$0xff]
          %v781 = vld [vmem:[%s362 + $0x58] sm:$0xff]
          %v782 = vld [vmem:[%s362 + $0x60] sm:$0xff]
          %v783 = vld [vmem:[%s362 + $0x68] sm:$0xff]
          %v784 = vld [vmem:[%s362 + $0x70] sm:$0xff]
          %v785 = vld [vmem:[%s362 + $0x78] sm:$0xff]
          %v786 = vld [vmem:[#allocation2] sm:$0xff]
          %v787 = vld [vmem:[#allocation2 + $0x8] sm:$0xff]
          %v788 = vld [vmem:[#allocation2 + $0x10] sm:$0xff]
          %v789 = vld [vmem:[#allocation2 + $0x18] sm:$0xff]
          %v790 = vld [vmem:[#allocation2 + $0x20] sm:$0xff]
          %v791 = vld [vmem:[#allocation2 + $0x28] sm:$0xff]
          %v792 = vld [vmem:[#allocation2 + $0x30] sm:$0xff]
          %v793 = vld [vmem:[#allocation2 + $0x38] sm:$0xff]
          %v794 = vld [vmem:[#allocation2 + $0x40] sm:$0xff]
          %v795 = vld [vmem:[#allocation2 + $0x48] sm:$0xff]
          %v796 = vld [vmem:[#allocation2 + $0x50] sm:$0xff]
          %v797 = vld [vmem:[#allocation2 + $0x58] sm:$0xff]
          %v798 = vld [vmem:[#allocation2 + $0x60] sm:$0xff]
          %v799 = vld [vmem:[#allocation2 + $0x68] sm:$0xff]
          %v800 = vld [vmem:[#allocation2 + $0x70] sm:$0xff]
          %v801 = vld [vmem:[#allocation2 + $0x78] sm:$0xff]
          %v802 = vadd.f32 %v770, %v786
          %v803 = vadd.f32 %v771, %v787
          %v804 = vadd.f32 %v772, %v788
          %v805 = vadd.f32 %v773, %v789
          %v806 = vadd.f32 %v774, %v790
          %v807 = vadd.f32 %v775, %v791
          %v808 = vadd.f32 %v776, %v792
          %v809 = vadd.f32 %v777, %v793
          %v810 = vadd.f32 %v778, %v794
          %v811 = vadd.f32 %v779, %v795
          %v812 = vadd.f32 %v780, %v796
          %v813 = vadd.f32 %v781, %v797
          %v814 = vadd.f32 %v782, %v798
          %v815 = vadd.f32 %v783, %v799
          %v816 = vadd.f32 %v784, %v800
          %v817 = vadd.f32 %v785, %v801
          %818 = vst [vmem:[%s374] sm:$0xff] %v802
          %819 = vst [vmem:[%s374 + $0x8] sm:$0xff] %v803
          %820 = vst [vmem:[%s374 + $0x10] sm:$0xff] %v804
          %821 = vst [vmem:[%s374 + $0x18] sm:$0xff] %v805
          %822 = vst [vmem:[%s374 + $0x20] sm:$0xff] %v806
          %823 = vst [vmem:[%s374 + $0x28] sm:$0xff] %v807
          %824 = vst [vmem:[%s374 + $0x30] sm:$0xff] %v808
          %825 = vst [vmem:[%s374 + $0x38] sm:$0xff] %v809
          %826 = vst [vmem:[%s374 + $0x40] sm:$0xff] %v810
          %827 = vst [vmem:[%s374 + $0x48] sm:$0xff] %v811
          %828 = vst [vmem:[%s374 + $0x50] sm:$0xff] %v812
          %829 = vst [vmem:[%s374 + $0x58] sm:$0xff] %v813
          %830 = vst [vmem:[%s374 + $0x60] sm:$0xff] %v814
          %831 = vst [vmem:[%s374 + $0x68] sm:$0xff] %v815
          %832 = vst [vmem:[%s374 + $0x70] sm:$0xff] %v816
          %833 = vst [vmem:[%s374 + $0x78] sm:$0xff] %v817
        $region81: #{lightgcn_forward.4} parent=68 // pred_fallthru
          _
        %s834 = smul.u32 16, %s20
        %p835 = scmp.lt.s32.totalorder %s834, 31
        %s836 = scalar_select %p835, %s834, 31
        %s837 = smul.addr %s836, 4
        %s838 = scalar_lea.vmem %s3, %s837
        %s839 = smul.u32 16, %s20
        %p840 = scmp.lt.s32.totalorder %s839, 31
        %s841 = scalar_select %p840, %s839, 31
        %s842 = smul.addr %s841, 8
        %s843 = scalar_lea.vmem %s4, %s842
        // Predicated region
        $region82: #{lightgcn_forward.4} parent=68 // pred_check
          %p844 = pneg %p126
        $region83: #{lightgcn_forward.4} parent=68 // pred_check_branch
          %846 = sbr.rel (%p844) target = $region85
        $region84: #{lightgcn_forward.4} parent=68 // pred_region
          %s847 = smul.u32 16, %s20
        $region85: #{lightgcn_forward.4} parent=68 // pred_fallthru
          _
        // Predicated region
        $region86: #{lightgcn_forward.4} parent=68 // pred_check
          %p848 = pneg %p152
        $region87: #{lightgcn_forward.4} parent=68 // pred_check_branch
          %850 = sbr.rel (%p848) target = $region89
        $region88: #{lightgcn_forward.4} parent=68 // pred_region
          %s851 = smul.u32 16, %s20
        $region89: #{lightgcn_forward.4} parent=68 // pred_fallthru
          _
      $region69: #{lightgcn_forward.4} parent=5 // pred_fallthru
        _
      %p852 = scmp.le.s32.totalorder 2, %s11
      // Predicated region
      $region90: #{lightgcn_forward.4} parent=5 // pred_check
        %p853 = pneg %p852
      $region91: #{lightgcn_forward.4} parent=5 // pred_check_branch
        %855 = sbr.rel (%p853) target = $region93
      $region92: #{lightgcn_forward.4} parent=5 // pred_region
        %s856 = ssub.s32 %s11, 2
        // Predicated region
        $region94: #{lightgcn_forward.4} parent=92 // pred_check
          %p857 = pneg %p132
        $region95: #{lightgcn_forward.4} parent=92 // pred_check_branch
          %859 = sbr.rel (%p857) target = $region97
        $region96: #{lightgcn_forward.4} parent=92 // pred_region
          %s860 = smul.u32 16, %s22
          %p861 = scmp.lt.s32.totalorder %s860, 31
          %s862 = scalar_select %p861, %s860, 31
          %s863 = smul.addr %s862, 4
          %s864 = scalar_lea.vmem %s3, %s863
        $region97: #{lightgcn_forward.4} parent=92 // pred_fallthru
          _
        // Predicated region
        $region98: #{lightgcn_forward.4} parent=92 // pred_check
          %p865 = pneg %p158
        $region99: #{lightgcn_forward.4} parent=92 // pred_check_branch
          %867 = sbr.rel (%p865) target = $region101
        $region100: #{lightgcn_forward.4} parent=92 // pred_region
          %s868 = smul.u32 16, %s22
          %p869 = scmp.lt.s32.totalorder %s868, 31
          %s870 = scalar_select %p869, %s868, 31
          %s871 = smul.addr %s870, 8
          %s872 = scalar_lea.vmem %s4, %s871
        $region101: #{lightgcn_forward.4} parent=92 // pred_fallthru
          _
      $region93: #{lightgcn_forward.4} parent=5 // pred_fallthru
        _
    $region6: #{lightgcn_forward.4} parent=1 // loop_footer
      %s15 = sadd.s32 1, %s11
    $region7: #{lightgcn_forward.4} parent=1 // loop_footer_branch
      %10 = sbr.rel target = $region3
    $region8: #{lightgcn_forward.4} parent=1 // loop_exit
      _

// kernel: lightgcn_forward.7
$region0: #{lightgcn_forward.7}
  #allocation0 [shape = 'u32[]', space=smem, size = 0x4, offset = 0x4, fixed_abs, tag = 'smem constant byte address 0x4 - core index']
  #allocation1 [shape = 'u32[144,128]{1,0:T(1,128)}', space=vmem, size = 0x12000, scoped, tag = 'internal scratch']
  %s0 = inlined_call_operand.vmem [shape: f32[128,128], index: 0, kind: input, shape index: {}]
  %s1 = inlined_call_operand.vmem [shape: f32[128,128], index: 1, kind: input, shape index: {}]
  %s2 = inlined_call_operand.vmem [shape: f32[1,128], index: 2, kind: output, shape index: {}]
  %s3 = sld [smem:[#allocation0]]
  $region18: #{lightgcn_forward.7} parent=0
    _
  %s5 = ssub.s32 1, %s3
  %s6 = scalar_select 0, %s5, %s3
  // Predicated region
  $region2: #{lightgcn_forward.7} parent=0 // pred_check
    _
  $region3: #{lightgcn_forward.7} parent=0 // pred_check_branch
    %8 = sbr.rel (0) target = $region5
  $region4: #{lightgcn_forward.7} parent=0 // pred_region
    _
  $region5: #{lightgcn_forward.7} parent=0 // pred_fallthru
    _
  // Predicated region
  $region6: #{lightgcn_forward.7} parent=0 // pred_check
    _
  $region7: #{lightgcn_forward.7} parent=0 // pred_check_branch
    %10 = sbr.rel (0) target = $region9
  $region8: #{lightgcn_forward.7} parent=0 // pred_region
    _
  $region9: #{lightgcn_forward.7} parent=0 // pred_fallthru
    _
  %v11 = vld [vmem:[%s0] sm:$0xff]
  %v12 = vld [vmem:[%s0 + $0x8] sm:$0xff]
  %v13 = vld [vmem:[%s0 + $0x10] sm:$0xff]
  %v14 = vld [vmem:[%s0 + $0x18] sm:$0xff]
  %v15 = vld [vmem:[%s0 + $0x20] sm:$0xff]
  %v16 = vld [vmem:[%s0 + $0x28] sm:$0xff]
  %v17 = vld [vmem:[%s0 + $0x30] sm:$0xff]
  %v18 = vld [vmem:[%s0 + $0x38] sm:$0xff]
  %v19 = vld [vmem:[%s0 + $0x40] sm:$0xff]
  %v20 = vld [vmem:[%s0 + $0x48] sm:$0xff]
  %v21 = vld [vmem:[%s0 + $0x50] sm:$0xff]
  %v22 = vld [vmem:[%s0 + $0x58] sm:$0xff]
  %v23 = vld [vmem:[%s0 + $0x60] sm:$0xff]
  %v24 = vld [vmem:[%s0 + $0x68] sm:$0xff]
  %v25 = vld [vmem:[%s0 + $0x70] sm:$0xff]
  %v26 = vld [vmem:[%s0 + $0x78] sm:$0xff]
  %v27 = vld [vmem:[%s1] sm:$0xff]
  %v28 = vld [vmem:[%s1 + $0x8] sm:$0xff]
  %v29 = vld [vmem:[%s1 + $0x10] sm:$0xff]
  %v30 = vld [vmem:[%s1 + $0x18] sm:$0xff]
  %v31 = vld [vmem:[%s1 + $0x20] sm:$0xff]
  %v32 = vld [vmem:[%s1 + $0x28] sm:$0xff]
  %v33 = vld [vmem:[%s1 + $0x30] sm:$0xff]
  %v34 = vld [vmem:[%s1 + $0x38] sm:$0xff]
  %v35 = vld [vmem:[%s1 + $0x40] sm:$0xff]
  %v36 = vld [vmem:[%s1 + $0x48] sm:$0xff]
  %v37 = vld [vmem:[%s1 + $0x50] sm:$0xff]
  %v38 = vld [vmem:[%s1 + $0x58] sm:$0xff]
  %v39 = vld [vmem:[%s1 + $0x60] sm:$0xff]
  %v40 = vld [vmem:[%s1 + $0x68] sm:$0xff]
  %v41 = vld [vmem:[%s1 + $0x70] sm:$0xff]
  %v42 = vld [vmem:[%s1 + $0x78] sm:$0xff]
  %v43 = vmul.f32 %v11, %v27
  %v44 = vmul.f32 %v12, %v28
  %v45 = vmul.f32 %v13, %v29
  %v46 = vmul.f32 %v14, %v30
  %v47 = vmul.f32 %v15, %v31
  %v48 = vmul.f32 %v16, %v32
  %v49 = vmul.f32 %v17, %v33
  %v50 = vmul.f32 %v18, %v34
  %v51 = vmul.f32 %v19, %v35
  %v52 = vmul.f32 %v20, %v36
  %v53 = vmul.f32 %v21, %v37
  %v54 = vmul.f32 %v22, %v38
  %v55 = vmul.f32 %v23, %v39
  %v56 = vmul.f32 %v24, %v40
  %v57 = vmul.f32 %v25, %v41
  %v58 = vmul.f32 %v26, %v42
  %v59 = vadd.f32 %v43, %v44
  %v60 = vadd.f32 %v59, %v45
  %v61 = vadd.f32 %v60, %v46
  %v62 = vadd.f32 %v61, %v47
  %v63 = vadd.f32 %v62, %v48
  %v64 = vadd.f32 %v63, %v49
  %v65 = vadd.f32 %v64, %v50
  %v66 = vadd.f32 %v65, %v51
  %v67 = vadd.f32 %v66, %v52
  %v68 = vadd.f32 %v67, %v53
  %v69 = vadd.f32 %v68, %v54
  %v70 = vadd.f32 %v69, %v55
  %v71 = vadd.f32 %v70, %v56
  %v72 = vadd.f32 %v71, %v57
  %v73 = vadd.f32 %v72, %v58
  %v74 = vrot.slane %v73, 4
  %v75 = vadd.f32 %v73, %v74
  %v76 = vrot.slane %v75, 2
  %v77 = vadd.f32 %v75, %v76
  %v78 = vrot.slane %v77, 1
  %v79 = vadd.f32 %v77, %v78
  %80 = vst [vmem:[%s2] sm:$0x1] %v79
  // Predicated region
  $region10: #{lightgcn_forward.7} parent=0 // pred_check
    _
  $region11: #{lightgcn_forward.7} parent=0 // pred_check_branch
    %82 = sbr.rel (0) target = $region13
  $region12: #{lightgcn_forward.7} parent=0 // pred_region
    _
  $region13: #{lightgcn_forward.7} parent=0 // pred_fallthru
    _
  // Predicated region
  $region14: #{lightgcn_forward.7} parent=0 // pred_check
    _
  $region15: #{lightgcn_forward.7} parent=0 // pred_check_branch
    %84 = sbr.rel (0) target = $region17
  $region16: #{lightgcn_forward.7} parent=0 // pred_region
    _
  $region17: #{lightgcn_forward.7} parent=0 // pred_fallthru
    _

</llo_original>
